<compile_context>
chip_gen: v6e
topology: v6e:2x2x1
jax: 0.10.0
libtpu: 0.0.40
codegen_flags: <defaults>
</compile_context>

<pallas_src>
import functools

import jax
import jax.numpy as jnp
from jax import lax
from jax.experimental import pallas as pl
from jax.experimental.pallas import tpu as pltpu


def _mh_attn_kernel(x_ref, wq_ref, wk_ref, wv_ref, wz_ref, bz_ref,
                    out_ref, attn_ref, *, embed_size, num_heads):
    D = embed_size
    H = num_heads

    x = x_ref[0]                                    # (S, D)
    S = x.shape[0]

    # Fused head projections: one lane-dense (S, H*D) matmul each.
    q_all = jnp.dot(x, wq_ref[...], preferred_element_type=jnp.float32)   # (S, H*D)
    k_all = jnp.dot(x, wk_ref[...], preferred_element_type=jnp.float32)   # (S, H*D)
    v_all = jnp.dot(x, wv_ref[...], preferred_element_type=jnp.float32)   # (S, H*D)

    # (q / D^0.25) @ (k / D^0.25)^T  ==  (q * D^-0.5) @ k^T  -- one scale, applied once.
    q_all = q_all * (1.0 / float(D) ** 0.5)

    z_heads = []
    attn_acc = jnp.zeros((S, S), jnp.float32)
    for h in range(H):                              # H is small & static; unrolled at trace
        qh = q_all[:, h * D:(h + 1) * D]            # (S, D)
        kh = k_all[:, h * D:(h + 1) * D]
        vh = v_all[:, h * D:(h + 1) * D]

        # q @ k^T via contraction on the last dims -- no explicit transpose of k.
        s = lax.dot_general(qh, kh, (((1,), (1,)), ((), ())),
                            preferred_element_type=jnp.float32)           # (S, S)

        # Numerically stable softmax over the last axis (f32 throughout).
        s = s - jnp.max(s, axis=-1, keepdims=True)
        e = jnp.exp(s)
        a = e * pl.reciprocal(jnp.sum(e, axis=-1, keepdims=True), approx=True)

        attn_acc = attn_acc + a
        z_heads.append(jnp.dot(a, vh, preferred_element_type=jnp.float32))  # (S, D)

    # Concatenated heads -> single lane-dense output projection.
    z_cat = jnp.concatenate(z_heads, axis=-1)                               # (S, H*D)
    out = jnp.dot(z_cat, wz_ref[...], preferred_element_type=jnp.float32)   # (S, D)

    # Single write of each output block (no accumulation across grid steps).
    out_ref[0] = out + bz_ref[...]                    # broadcast (1, D) -> (S, D)
    attn_ref[0] = attn_acc * (1.0 / float(H))


def mh_self_attention(x, wq_all, wk_all, wv_all, wz_all, bz):
    """x: (B, S, D); wq_all/wk_all/wv_all: (D, H*D); wz_all: (H*D, D); bz: (1, D).

    wq_all[:, h*D:(h+1)*D] == Wq_h.weight.T; wz_all == Wz.weight.T; bz == Wz.bias[None].
    Returns (Wz(concat_h z_h) + bias, mean_h attention_h).
    """
    B, S, D = x.shape
    HD = wq_all.shape[1]
    H = HD // D

    kernel = functools.partial(_mh_attn_kernel, embed_size=D, num_heads=H)

    const2 = lambda b: (0, 0)

    out, attn = pl.pallas_call(
        kernel,
        out_shape=(
            jax.ShapeDtypeStruct((B, S, D), jnp.float32),
            jax.ShapeDtypeStruct((B, S, S), jnp.float32),
        ),
        grid_spec=pltpu.PrefetchScalarGridSpec(
            num_scalar_prefetch=0,
            grid=(B,),
            in_specs=[
                pl.BlockSpec((1, S, D), lambda b: (b, 0, 0)),   # X (per-batch block)
                pl.BlockSpec((D, HD), const2),                  # Wq (all heads, fetched once)
                pl.BlockSpec((D, HD), const2),                  # Wk
                pl.BlockSpec((D, HD), const2),                  # Wv
                pl.BlockSpec((HD, D), const2),                  # Wz^T
                pl.BlockSpec((1, D), const2),                   # bias
            ],
            out_specs=[
                pl.BlockSpec((1, S, D), lambda b: (b, 0, 0)),   # projected output
                pl.BlockSpec((1, S, S), lambda b: (b, 0, 0)),   # mean attention
            ],
        ),
        compiler_params=pltpu.CompilerParams(
            dimension_semantics=("parallel",),      # batch axis -> megacore / v7x 2 TCs
            vmem_limit_bytes=32 * 1024 * 1024,
        ),
    )(x, wq_all, wk_all, wv_all, wz_all, bz)
    return out, attn


def mh_self_attention_ref(x, wq_all, wk_all, wv_all, wz_all, bz):
    """Pure-JAX reference reproducing the PyTorch forward semantics."""
    B, S, D = x.shape
    H = wq_all.shape[1] // D
    scale = float(D) ** 0.25

    q = (x @ wq_all).reshape(B, S, H, D)
    k = (x @ wk_all).reshape(B, S, H, D)
    v = (x @ wv_all).reshape(B, S, H, D)

    s = jnp.einsum('bqhd,bkhd->bhqk', q / scale, k / scale)
    a = jax.nn.softmax(s, axis=-1)                        # (B, H, S, S)
    z = jnp.einsum('bhqk,bkhd->bqhd', a, v)               # (B, S, H, D)
    z_cat = z.reshape(B, S, H * D)                        # head-major concat (matches torch.cat)

    out = z_cat @ wz_all + bz[0]
    attn_mean = a.mean(axis=1)                            # (B, S, S)
    return out, attn_mean


if __name__ == "__main__":
    B, S, D, H = 2, 8, 32, 4   # batch, seq, input_size(=embed_size), num_attn_heads

    key = jax.random.PRNGKey(0)
    kx, kq, kk, kv, kz, kb = jax.random.split(key, 6)

    x = jax.random.normal(kx, (B, S, D), jnp.float32)
    wq_all = jax.random.normal(kq, (D, H * D), jnp.float32) * 0.1   # concat_h Wq_h.weight.T
    wk_all = jax.random.normal(kk, (D, H * D), jnp.float32) * 0.1
    wv_all = jax.random.normal(kv, (D, H * D), jnp.float32) * 0.1
    wz_all = jax.random.normal(kz, (H * D, D), jnp.float32) * 0.1   # Wz.weight.T
    bz = jax.random.normal(kb, (1, D), jnp.float32) * 0.1

    out, attn = mh_self_attention(x, wq_all, wk_all, wv_all, wz_all, bz)
    jax.block_until_ready((out, attn))

    out_ref, attn_ref = mh_self_attention_ref(x, wq_all, wk_all, wv_all, wz_all, bz)
    # Tolerances account for the EUP approximate reciprocal in the softmax denominator.
    assert jnp.allclose(out, out_ref, atol=2e-3, rtol=2e-3), "output mismatch"
    assert jnp.allclose(attn, attn_ref, atol=2e-3, rtol=2e-3), "attention mismatch"

    print("KERNEL_OK")
</pallas_src>

<mosaic_0001>
module attributes {stable_mosaic.version = 11 : i64} {
  func.func @_mh_attn_kernel(%arg0: i32, %arg1: memref<1x8x32xf32, #tpu.memory_space<vmem>>, %arg2: memref<32x128xf32, #tpu.memory_space<vmem>>, %arg3: memref<32x128xf32, #tpu.memory_space<vmem>>, %arg4: memref<32x128xf32, #tpu.memory_space<vmem>>, %arg5: memref<128x32xf32, #tpu.memory_space<vmem>>, %arg6: memref<1x32xf32, #tpu.memory_space<vmem>>, %arg7: memref<1x8x32xf32, #tpu.memory_space<vmem>>, %arg8: memref<1x8x8xf32, #tpu.memory_space<vmem>>) attributes {dimension_semantics = [#tpu.dimension_semantics<parallel>], iteration_bounds = array<i64: 2>, scalar_prefetch = 0 : i64, scratch_operands = 0 : i64, tpu.core_type = #tpu.core_type<tc>, window_params = [{transform_indices = @transform_0, window_bounds = array<i64: 1, 8, 32>}, {pipeline_mode = #tpu.pipeline_mode<synchronous>, transform_indices = @transform_1, window_bounds = array<i64: 32, 128>}, {pipeline_mode = #tpu.pipeline_mode<synchronous>, transform_indices = @transform_2, window_bounds = array<i64: 32, 128>}, {pipeline_mode = #tpu.pipeline_mode<synchronous>, transform_indices = @transform_3, window_bounds = array<i64: 32, 128>}, {pipeline_mode = #tpu.pipeline_mode<synchronous>, transform_indices = @transform_4, window_bounds = array<i64: 128, 32>}, {pipeline_mode = #tpu.pipeline_mode<synchronous>, transform_indices = @transform_5, window_bounds = array<i64: 1, 32>}, {transform_indices = @transform_6, window_bounds = array<i64: 1, 8, 32>}, {transform_indices = @transform_7, window_bounds = array<i64: 1, 8, 8>}]} {
    %c0 = arith.constant 0 : index
    %c0_0 = arith.constant 0 : index
    %c0_1 = arith.constant 0 : index
    %0 = vector.load %arg1[%c0, %c0_0, %c0_1] : memref<1x8x32xf32, #tpu.memory_space<vmem>>, vector<1x8x32xf32>
    %1 = vector.shape_cast %0 : vector<1x8x32xf32> to vector<8x32xf32>
    %c0_2 = arith.constant 0 : index
    %c0_3 = arith.constant 0 : index
    %2 = vector.load %arg2[%c0_2, %c0_3] : memref<32x128xf32, #tpu.memory_space<vmem>>, vector<32x128xf32>
    %cst = arith.constant dense<0.000000e+00> : vector<8x128xf32>
    %3 = tpu.matmul %1, %2, %cst {dimension_numbers = #tpu.dot_dimension_numbers<[1], [0], [0], [1], [0, 0, 1, 1], [], []>} : vector<8x32xf32>, vector<32x128xf32>, vector<8x128xf32> -> vector<8x128xf32>
    %c0_4 = arith.constant 0 : index
    %c0_5 = arith.constant 0 : index
    %4 = vector.load %arg3[%c0_4, %c0_5] : memref<32x128xf32, #tpu.memory_space<vmem>>, vector<32x128xf32>
    %cst_6 = arith.constant dense<0.000000e+00> : vector<8x128xf32>
    %5 = tpu.matmul %1, %4, %cst_6 {dimension_numbers = #tpu.dot_dimension_numbers<[1], [0], [0], [1], [0, 0, 1, 1], [], []>} : vector<8x32xf32>, vector<32x128xf32>, vector<8x128xf32> -> vector<8x128xf32>
    %c0_7 = arith.constant 0 : index
    %c0_8 = arith.constant 0 : index
    %6 = vector.load %arg4[%c0_7, %c0_8] : memref<32x128xf32, #tpu.memory_space<vmem>>, vector<32x128xf32>
    %cst_9 = arith.constant dense<0.000000e+00> : vector<8x128xf32>
    %7 = tpu.matmul %1, %6, %cst_9 {dimension_numbers = #tpu.dot_dimension_numbers<[1], [0], [0], [1], [0, 0, 1, 1], [], []>} : vector<8x32xf32>, vector<32x128xf32>, vector<8x128xf32> -> vector<8x128xf32>
    %cst_10 = arith.constant 0.176776692 : f32
    %8 = vector.broadcast %cst_10 : f32 to vector<8x128xf32>
    %9 = arith.mulf %3, %8 : vector<8x128xf32>
    %cst_11 = arith.constant 0.000000e+00 : f32
    %10 = vector.broadcast %cst_11 : f32 to vector<8x8xf32>
    %11 = vector.extract_strided_slice %9 {offsets = [0, 0], sizes = [8, 32], strides = [1, 1]} : vector<8x128xf32> to vector<8x32xf32>
    %12 = vector.extract_strided_slice %5 {offsets = [0, 0], sizes = [8, 32], strides = [1, 1]} : vector<8x128xf32> to vector<8x32xf32>
    %13 = vector.extract_strided_slice %7 {offsets = [0, 0], sizes = [8, 32], strides = [1, 1]} : vector<8x128xf32> to vector<8x32xf32>
    %cst_12 = arith.constant dense<0.000000e+00> : vector<8x8xf32>
    %14 = tpu.matmul %11, %12, %cst_12 {dimension_numbers = #tpu.dot_dimension_numbers<[1], [1], [0], [0], [0, 0, 1, 0], [], []>} : vector<8x32xf32>, vector<8x32xf32>, vector<8x8xf32> -> vector<8x8xf32>
    %cst_13 = arith.constant dense<0xFF800000> : vector<8xf32>
    %15 = vector.multi_reduction <maximumf>, %14, %cst_13 [1] : vector<8x8xf32> to vector<8xf32>
    %16 = vector.shape_cast %15 : vector<8xf32> to vector<8x1xf32>
    %17 = vector.broadcast %16 : vector<8x1xf32> to vector<8x8xf32>
    %18 = arith.subf %14, %17 : vector<8x8xf32>
    %19 = math.exp %18 : vector<8x8xf32>
    %cst_14 = arith.constant dense<0.000000e+00> : vector<8xf32>
    %20 = vector.multi_reduction <add>, %19, %cst_14 [1] : vector<8x8xf32> to vector<8xf32>
    %21 = vector.shape_cast %20 : vector<8xf32> to vector<8x1xf32>
    %22 = tpu.reciprocal %21 {approx = true} : vector<8x1xf32> -> vector<8x1xf32>
    %23 = vector.broadcast %22 : vector<8x1xf32> to vector<8x8xf32>
    %24 = arith.mulf %19, %23 : vector<8x8xf32>
    %25 = arith.addf %10, %24 : vector<8x8xf32>
    %cst_15 = arith.constant dense<0.000000e+00> : vector<8x32xf32>
    %26 = tpu.matmul %24, %13, %cst_15 {dimension_numbers = #tpu.dot_dimension_numbers<[1], [0], [0], [1], [0, 0, 1, 1], [], []>} : vector<8x8xf32>, vector<8x32xf32>, vector<8x32xf32> -> vector<8x32xf32>
    %27 = vector.extract_strided_slice %9 {offsets = [0, 32], sizes = [8, 32], strides = [1, 1]} : vector<8x128xf32> to vector<8x32xf32>
    %28 = vector.extract_strided_slice %5 {offsets = [0, 32], sizes = [8, 32], strides = [1, 1]} : vector<8x128xf32> to vector<8x32xf32>
    %29 = vector.extract_strided_slice %7 {offsets = [0, 32], sizes = [8, 32], strides = [1, 1]} : vector<8x128xf32> to vector<8x32xf32>
    %cst_16 = arith.constant dense<0.000000e+00> : vector<8x8xf32>
    %30 = tpu.matmul %27, %28, %cst_16 {dimension_numbers = #tpu.dot_dimension_numbers<[1], [1], [0], [0], [0, 0, 1, 0], [], []>} : vector<8x32xf32>, vector<8x32xf32>, vector<8x8xf32> -> vector<8x8xf32>
    %cst_17 = arith.constant dense<0xFF800000> : vector<8xf32>
    %31 = vector.multi_reduction <maximumf>, %30, %cst_17 [1] : vector<8x8xf32> to vector<8xf32>
    %32 = vector.shape_cast %31 : vector<8xf32> to vector<8x1xf32>
    %33 = vector.broadcast %32 : vector<8x1xf32> to vector<8x8xf32>
    %34 = arith.subf %30, %33 : vector<8x8xf32>
    %35 = math.exp %34 : vector<8x8xf32>
    %cst_18 = arith.constant dense<0.000000e+00> : vector<8xf32>
    %36 = vector.multi_reduction <add>, %35, %cst_18 [1] : vector<8x8xf32> to vector<8xf32>
    %37 = vector.shape_cast %36 : vector<8xf32> to vector<8x1xf32>
    %38 = tpu.reciprocal %37 {approx = true} : vector<8x1xf32> -> vector<8x1xf32>
    %39 = vector.broadcast %38 : vector<8x1xf32> to vector<8x8xf32>
    %40 = arith.mulf %35, %39 : vector<8x8xf32>
    %41 = arith.addf %25, %40 : vector<8x8xf32>
    %cst_19 = arith.constant dense<0.000000e+00> : vector<8x32xf32>
    %42 = tpu.matmul %40, %29, %cst_19 {dimension_numbers = #tpu.dot_dimension_numbers<[1], [0], [0], [1], [0, 0, 1, 1], [], []>} : vector<8x8xf32>, vector<8x32xf32>, vector<8x32xf32> -> vector<8x32xf32>
    %43 = vector.extract_strided_slice %9 {offsets = [0, 64], sizes = [8, 32], strides = [1, 1]} : vector<8x128xf32> to vector<8x32xf32>
    %44 = vector.extract_strided_slice %5 {offsets = [0, 64], sizes = [8, 32], strides = [1, 1]} : vector<8x128xf32> to vector<8x32xf32>
    %45 = vector.extract_strided_slice %7 {offsets = [0, 64], sizes = [8, 32], strides = [1, 1]} : vector<8x128xf32> to vector<8x32xf32>
    %cst_20 = arith.constant dense<0.000000e+00> : vector<8x8xf32>
    %46 = tpu.matmul %43, %44, %cst_20 {dimension_numbers = #tpu.dot_dimension_numbers<[1], [1], [0], [0], [0, 0, 1, 0], [], []>} : vector<8x32xf32>, vector<8x32xf32>, vector<8x8xf32> -> vector<8x8xf32>
    %cst_21 = arith.constant dense<0xFF800000> : vector<8xf32>
    %47 = vector.multi_reduction <maximumf>, %46, %cst_21 [1] : vector<8x8xf32> to vector<8xf32>
    %48 = vector.shape_cast %47 : vector<8xf32> to vector<8x1xf32>
    %49 = vector.broadcast %48 : vector<8x1xf32> to vector<8x8xf32>
    %50 = arith.subf %46, %49 : vector<8x8xf32>
    %51 = math.exp %50 : vector<8x8xf32>
    %cst_22 = arith.constant dense<0.000000e+00> : vector<8xf32>
    %52 = vector.multi_reduction <add>, %51, %cst_22 [1] : vector<8x8xf32> to vector<8xf32>
    %53 = vector.shape_cast %52 : vector<8xf32> to vector<8x1xf32>
    %54 = tpu.reciprocal %53 {approx = true} : vector<8x1xf32> -> vector<8x1xf32>
    %55 = vector.broadcast %54 : vector<8x1xf32> to vector<8x8xf32>
    %56 = arith.mulf %51, %55 : vector<8x8xf32>
    %57 = arith.addf %41, %56 : vector<8x8xf32>
    %cst_23 = arith.constant dense<0.000000e+00> : vector<8x32xf32>
    %58 = tpu.matmul %56, %45, %cst_23 {dimension_numbers = #tpu.dot_dimension_numbers<[1], [0], [0], [1], [0, 0, 1, 1], [], []>} : vector<8x8xf32>, vector<8x32xf32>, vector<8x32xf32> -> vector<8x32xf32>
    %59 = vector.extract_strided_slice %9 {offsets = [0, 96], sizes = [8, 32], strides = [1, 1]} : vector<8x128xf32> to vector<8x32xf32>
    %60 = vector.extract_strided_slice %5 {offsets = [0, 96], sizes = [8, 32], strides = [1, 1]} : vector<8x128xf32> to vector<8x32xf32>
    %61 = vector.extract_strided_slice %7 {offsets = [0, 96], sizes = [8, 32], strides = [1, 1]} : vector<8x128xf32> to vector<8x32xf32>
    %cst_24 = arith.constant dense<0.000000e+00> : vector<8x8xf32>
    %62 = tpu.matmul %59, %60, %cst_24 {dimension_numbers = #tpu.dot_dimension_numbers<[1], [1], [0], [0], [0, 0, 1, 0], [], []>} : vector<8x32xf32>, vector<8x32xf32>, vector<8x8xf32> -> vector<8x8xf32>
    %cst_25 = arith.constant dense<0xFF800000> : vector<8xf32>
    %63 = vector.multi_reduction <maximumf>, %62, %cst_25 [1] : vector<8x8xf32> to vector<8xf32>
    %64 = vector.shape_cast %63 : vector<8xf32> to vector<8x1xf32>
    %65 = vector.broadcast %64 : vector<8x1xf32> to vector<8x8xf32>
    %66 = arith.subf %62, %65 : vector<8x8xf32>
    %67 = math.exp %66 : vector<8x8xf32>
    %cst_26 = arith.constant dense<0.000000e+00> : vector<8xf32>
    %68 = vector.multi_reduction <add>, %67, %cst_26 [1] : vector<8x8xf32> to vector<8xf32>
    %69 = vector.shape_cast %68 : vector<8xf32> to vector<8x1xf32>
    %70 = tpu.reciprocal %69 {approx = true} : vector<8x1xf32> -> vector<8x1xf32>
    %71 = vector.broadcast %70 : vector<8x1xf32> to vector<8x8xf32>
    %72 = arith.mulf %67, %71 : vector<8x8xf32>
    %73 = arith.addf %57, %72 : vector<8x8xf32>
    %cst_27 = arith.constant dense<0.000000e+00> : vector<8x32xf32>
    %74 = tpu.matmul %72, %61, %cst_27 {dimension_numbers = #tpu.dot_dimension_numbers<[1], [0], [0], [1], [0, 0, 1, 1], [], []>} : vector<8x8xf32>, vector<8x32xf32>, vector<8x32xf32> -> vector<8x32xf32>
    %75 = tpu.concatenate %26, %42, %58, %74 in 1 : vector<8x32xf32>, vector<8x32xf32>, vector<8x32xf32>, vector<8x32xf32> -> vector<8x128xf32>
    %c0_28 = arith.constant 0 : index
    %c0_29 = arith.constant 0 : index
    %76 = vector.load %arg5[%c0_28, %c0_29] : memref<128x32xf32, #tpu.memory_space<vmem>>, vector<128x32xf32>
    %cst_30 = arith.constant dense<0.000000e+00> : vector<8x32xf32>
    %77 = tpu.matmul %75, %76, %cst_30 {dimension_numbers = #tpu.dot_dimension_numbers<[1], [0], [0], [1], [0, 0, 1, 1], [], []>} : vector<8x128xf32>, vector<128x32xf32>, vector<8x32xf32> -> vector<8x32xf32>
    %c0_31 = arith.constant 0 : index
    %c0_32 = arith.constant 0 : index
    %78 = vector.load %arg6[%c0_31, %c0_32] : memref<1x32xf32, #tpu.memory_space<vmem>>, vector<1x32xf32>
    %79 = vector.broadcast %78 : vector<1x32xf32> to vector<8x32xf32>
    %80 = arith.addf %77, %79 : vector<8x32xf32>
    %c0_33 = arith.constant 0 : index
    %c0_34 = arith.constant 0 : index
    %c0_35 = arith.constant 0 : index
    %81 = vector.load %arg7[%c0_33, %c0_34, %c0_35] : memref<1x8x32xf32, #tpu.memory_space<vmem>>, vector<1x8x32xf32>
    %82 = vector.shape_cast %81 : vector<1x8x32xf32> to vector<8x32xf32>
    %83 = vector.shape_cast %80 : vector<8x32xf32> to vector<1x8x32xf32>
    tpu.vector_store %arg7[%c0_33, %c0_34, %c0_35], %83 {strides = array<i32>} : memref<1x8x32xf32, #tpu.memory_space<vmem>>, vector<1x8x32xf32>,
    %cst_36 = arith.constant 2.500000e-01 : f32
    %84 = vector.broadcast %cst_36 : f32 to vector<8x8xf32>
    %85 = arith.mulf %73, %84 : vector<8x8xf32>
    %c0_37 = arith.constant 0 : index
    %c0_38 = arith.constant 0 : index
    %c0_39 = arith.constant 0 : index
    %86 = vector.load %arg8[%c0_37, %c0_38, %c0_39] : memref<1x8x8xf32, #tpu.memory_space<vmem>>, vector<1x8x8xf32>
    %87 = vector.shape_cast %86 : vector<1x8x8xf32> to vector<8x8xf32>
    %88 = vector.shape_cast %85 : vector<8x8xf32> to vector<1x8x8xf32>
    tpu.vector_store %arg8[%c0_37, %c0_38, %c0_39], %88 {strides = array<i32>} : memref<1x8x8xf32, #tpu.memory_space<vmem>>, vector<1x8x8xf32>,
    return
  }
  func.func @transform_0(%arg0: i32) -> (i32, i32, i32) {
    %c0_i32 = arith.constant 0 : i32
    %c0_i32_0 = arith.constant 0 : i32
    %c0_i32_1 = arith.constant 0 : i32
    return %arg0, %c0_i32, %c0_i32_0 : i32, i32, i32
  }
  func.func @transform_1(%arg0: i32) -> (i32, i32) {
    %c0_i32 = arith.constant 0 : i32
    %c0_i32_0 = arith.constant 0 : i32
    %c0_i32_1 = arith.constant 0 : i32
    return %c0_i32, %c0_i32_0 : i32, i32
  }
  func.func @transform_2(%arg0: i32) -> (i32, i32) {
    %c0_i32 = arith.constant 0 : i32
    %c0_i32_0 = arith.constant 0 : i32
    %c0_i32_1 = arith.constant 0 : i32
    return %c0_i32, %c0_i32_0 : i32, i32
  }
  func.func @transform_3(%arg0: i32) -> (i32, i32) {
    %c0_i32 = arith.constant 0 : i32
    %c0_i32_0 = arith.constant 0 : i32
    %c0_i32_1 = arith.constant 0 : i32
    return %c0_i32, %c0_i32_0 : i32, i32
  }
  func.func @transform_4(%arg0: i32) -> (i32, i32) {
    %c0_i32 = arith.constant 0 : i32
    %c0_i32_0 = arith.constant 0 : i32
    %c0_i32_1 = arith.constant 0 : i32
    return %c0_i32, %c0_i32_0 : i32, i32
  }
  func.func @transform_5(%arg0: i32) -> (i32, i32) {
    %c0_i32 = arith.constant 0 : i32
    %c0_i32_0 = arith.constant 0 : i32
    %c0_i32_1 = arith.constant 0 : i32
    return %c0_i32, %c0_i32_0 : i32, i32
  }
  func.func @transform_6(%arg0: i32) -> (i32, i32, i32) {
    %c0_i32 = arith.constant 0 : i32
    %c0_i32_0 = arith.constant 0 : i32
    %c0_i32_1 = arith.constant 0 : i32
    return %arg0, %c0_i32, %c0_i32_0 : i32, i32, i32
  }
  func.func @transform_7(%arg0: i32) -> (i32, i32, i32) {
    %c0_i32 = arith.constant 0 : i32
    %c0_i32_0 = arith.constant 0 : i32
    %c0_i32_1 = arith.constant 0 : i32
    return %arg0, %c0_i32, %c0_i32_0 : i32, i32, i32
  }
}

</mosaic_0001>

<llo_original>
// kernel: tpu_custom_call.1
$region0: #{tpu_custom_call.1}
  #allocation0 [shape = 'u32[]', space=smem, size = 0x4, offset = 0x4, fixed_abs, tag = 'smem constant byte address 0x4 - core index']
  #allocation1 [shape = 'u32[144,128]{1,0:T(1,128)}', space=vmem, size = 0x12000, scoped, tag = 'internal scratch']
  %s0 = inlined_call_operand.vmem [shape: f32[2,8,32], index: 0, kind: input, shape index: {}]
  %s1 = inlined_call_operand.vmem [shape: f32[32,128], index: 1, kind: input, shape index: {}]
  %s2 = inlined_call_operand.vmem [shape: f32[32,128], index: 2, kind: input, shape index: {}]
  %s3 = inlined_call_operand.vmem [shape: f32[32,128], index: 3, kind: input, shape index: {}]
  %s4 = inlined_call_operand.vmem [shape: f32[128,32], index: 4, kind: input, shape index: {}]
  %s5 = inlined_call_operand.vmem [shape: f32[1,32], index: 5, kind: input, shape index: {}]
  %s6 = inlined_call_operand.hbm [shape: f32[2,8,32], index: 6, kind: output, shape index: {0}]
  %s7 = inlined_call_operand.hbm [shape: f32[2,8,8], index: 7, kind: output, shape index: {1}]
  %8 = xla_tuple %s6, %s7
  %s9 = sld [smem:[#allocation0]]
  $region65: #{tpu_custom_call.1} parent=0
    _
  %s11 = ssub.s32 1, %s9
  %s12 = scalar_select 0, %s11, %s9
  $region1: #{tpu_custom_call.1} parent=0
    #allocation2 [shape = 'u8[8192]{0}', space=vmem, size = 0x2000, scoped, tag = 'output window, operand 0']
    #allocation3 [shape = 's32[2]{0}', space=sflag, size = 0x8, scoped, tag = 'scoped memory for tpu_custom_call.1']
    #allocation4 [shape = 'u8[8192]{0}', space=vmem, size = 0x2000, scoped, tag = 'output window, operand 1']
    #allocation5 [shape = 's32[2]{0}', space=sflag, size = 0x8, scoped, tag = 'scoped memory for tpu_custom_call.1']
    %13 = vsyncpa [#allocation3], 0
    %s14 = scalar_lea.sflag [#allocation3], 1
    %15 = vsyncpa %s14, 0
    %16 = vsyncpa [#allocation5], 0
    %s17 = scalar_lea.sflag [#allocation5], 1
    %18 = vsyncpa %s17, 0
    loop: start=0, step=1, limit=4
    $region2: #{tpu_custom_call.1} parent=1 // loop_pre_header
      _
    $region3: #{tpu_custom_call.1} parent=1 // loop_header
      %s20 = sphi 0, %s24
      %p21 = scmp.ge.s32.totalorder %s20, 4
      %s30 = sphi 0, %s32
      %s33 = sphi 0, %s30
      %s34 = sphi 0, %s33
      %s50 = sphi 0, %s34
      %s54 = sphi 0, %s54
      %s56 = sphi 0, %s54
      %s57 = sphi 0, %s56
      %s71 = sphi 0, %s57
      %s75 = sphi 0, %s75
      %s77 = sphi 0, %s75
      %s78 = sphi 0, %s77
      %s92 = sphi 0, %s78
      %s96 = sphi 0, %s96
      %s98 = sphi 0, %s96
      %s99 = sphi 0, %s98
      %s113 = sphi 0, %s99
      %s117 = sphi 0, %s117
      %s119 = sphi 0, %s117
      %s120 = sphi 0, %s119
      %s134 = sphi 0, %s120
      %s138 = sphi 0, %s138
      %s140 = sphi 0, %s138
      %s141 = sphi 0, %s140
      %s155 = sphi 0, %s141
      %s161 = sphi 0, %s163
      %s164 = sphi 0, %s161
      %s165 = sphi 0, %s164
      %s181 = sphi 0, %s165
      %s187 = sphi 0, %s189
      %s190 = sphi 0, %s187
      %s191 = sphi 0, %s190
      %s207 = sphi 0, %s191
    $region4: #{tpu_custom_call.1} parent=1 // loop_header_branch
      %23 = sbr.rel (%p21) target = $region8
    $region5: #{tpu_custom_call.1} parent=1 // loop_body
      %s25 = ssub.s32 %s20, 1
      %s26 = ssub.s32 %s20, 2
      %s27 = sadd.s32 %s20, 1
      %s28 = ssub.s32 %s20, %s27
      %p29 = scmp.eq.s32.totalorder %s28, 0
      %s31 = sadd.s32 %s30, 1
      %s32 = scalar_select %p29, %s30, %s31
      %p35 = pneg %p29
      %p36 = scmp.eq.s32.totalorder %s20, 1
      %p37 = por %p35, %p36
      %p38 = scmp.ne.s32.totalorder %s30, %s33
      %p39 = scmp.eq.s32.totalorder %s20, 0
      %p40 = por %p38, %p39
      %p41 = scmp.ne.s32.totalorder %s30, %s33
      %p42 = scmp.eq.s32.totalorder %s25, 1
      %p43 = por %p41, %p42
      %p44 = scmp.ne.s32.totalorder %s33, %s34
      %p45 = scmp.eq.s32.totalorder %s25, 0
      %p46 = por %p44, %p45
      %p47 = scmp.ne.s32.totalorder %s33, %s34
      %p48 = scmp.eq.s32.totalorder %s26, 1
      %p49 = por %p47, %p48
      %p51 = scmp.ne.s32.totalorder %s34, %s50
      %p52 = scmp.eq.s32.totalorder %s26, 0
      %p53 = por %p51, %p52
      %s55 = sadd.s32 %s54, 1
      %p58 = scmp.eq.s32.totalorder %s20, 1
      %p59 = scmp.ne.s32.totalorder %s54, %s56
      %p60 = scmp.eq.s32.totalorder %s20, 0
      %p61 = por %p59, %p60
      %p62 = scmp.ne.s32.totalorder %s54, %s56
      %p63 = scmp.eq.s32.totalorder %s25, 1
      %p64 = por %p62, %p63
      %p65 = scmp.ne.s32.totalorder %s56, %s57
      %p66 = scmp.eq.s32.totalorder %s25, 0
      %p67 = por %p65, %p66
      %p68 = scmp.ne.s32.totalorder %s56, %s57
      %p69 = scmp.eq.s32.totalorder %s26, 1
      %p70 = por %p68, %p69
      %p72 = scmp.ne.s32.totalorder %s57, %s71
      %p73 = scmp.eq.s32.totalorder %s26, 0
      %p74 = por %p72, %p73
      %s76 = sadd.s32 %s75, 1
      %p79 = scmp.eq.s32.totalorder %s20, 1
      %p80 = scmp.ne.s32.totalorder %s75, %s77
      %p81 = scmp.eq.s32.totalorder %s20, 0
      %p82 = por %p80, %p81
      %p83 = scmp.ne.s32.totalorder %s75, %s77
      %p84 = scmp.eq.s32.totalorder %s25, 1
      %p85 = por %p83, %p84
      %p86 = scmp.ne.s32.totalorder %s77, %s78
      %p87 = scmp.eq.s32.totalorder %s25, 0
      %p88 = por %p86, %p87
      %p89 = scmp.ne.s32.totalorder %s77, %s78
      %p90 = scmp.eq.s32.totalorder %s26, 1
      %p91 = por %p89, %p90
      %p93 = scmp.ne.s32.totalorder %s78, %s92
      %p94 = scmp.eq.s32.totalorder %s26, 0
      %p95 = por %p93, %p94
      %s97 = sadd.s32 %s96, 1
      %p100 = scmp.eq.s32.totalorder %s20, 1
      %p101 = scmp.ne.s32.totalorder %s96, %s98
      %p102 = scmp.eq.s32.totalorder %s20, 0
      %p103 = por %p101, %p102
      %p104 = scmp.ne.s32.totalorder %s96, %s98
      %p105 = scmp.eq.s32.totalorder %s25, 1
      %p106 = por %p104, %p105
      %p107 = scmp.ne.s32.totalorder %s98, %s99
      %p108 = scmp.eq.s32.totalorder %s25, 0
      %p109 = por %p107, %p108
      %p110 = scmp.ne.s32.totalorder %s98, %s99
      %p111 = scmp.eq.s32.totalorder %s26, 1
      %p112 = por %p110, %p111
      %p114 = scmp.ne.s32.totalorder %s99, %s113
      %p115 = scmp.eq.s32.totalorder %s26, 0
      %p116 = por %p114, %p115
      %s118 = sadd.s32 %s117, 1
      %p121 = scmp.eq.s32.totalorder %s20, 1
      %p122 = scmp.ne.s32.totalorder %s117, %s119
      %p123 = scmp.eq.s32.totalorder %s20, 0
      %p124 = por %p122, %p123
      %p125 = scmp.ne.s32.totalorder %s117, %s119
      %p126 = scmp.eq.s32.totalorder %s25, 1
      %p127 = por %p125, %p126
      %p128 = scmp.ne.s32.totalorder %s119, %s120
      %p129 = scmp.eq.s32.totalorder %s25, 0
      %p130 = por %p128, %p129
      %p131 = scmp.ne.s32.totalorder %s119, %s120
      %p132 = scmp.eq.s32.totalorder %s26, 1
      %p133 = por %p131, %p132
      %p135 = scmp.ne.s32.totalorder %s120, %s134
      %p136 = scmp.eq.s32.totalorder %s26, 0
      %p137 = por %p135, %p136
      %s139 = sadd.s32 %s138, 1
      %p142 = scmp.eq.s32.totalorder %s20, 1
      %p143 = scmp.ne.s32.totalorder %s138, %s140
      %p144 = scmp.eq.s32.totalorder %s20, 0
      %p145 = por %p143, %p144
      %p146 = scmp.ne.s32.totalorder %s138, %s140
      %p147 = scmp.eq.s32.totalorder %s25, 1
      %p148 = por %p146, %p147
      %p149 = scmp.ne.s32.totalorder %s140, %s141
      %p150 = scmp.eq.s32.totalorder %s25, 0
      %p151 = por %p149, %p150
      %p152 = scmp.ne.s32.totalorder %s140, %s141
      %p153 = scmp.eq.s32.totalorder %s26, 1
      %p154 = por %p152, %p153
      %p156 = scmp.ne.s32.totalorder %s141, %s155
      %p157 = scmp.eq.s32.totalorder %s26, 0
      %p158 = por %p156, %p157
      %s159 = ssub.s32 %s20, %s27
      %p160 = scmp.eq.s32.totalorder %s159, 0
      %s162 = sadd.s32 %s161, 1
      %s163 = scalar_select %p160, %s161, %s162
      %p166 = pneg %p160
      %p167 = scmp.eq.s32.totalorder %s20, 1
      %p168 = por %p166, %p167
      %p169 = scmp.ne.s32.totalorder %s161, %s164
      %p170 = scmp.eq.s32.totalorder %s20, 0
      %p171 = por %p169, %p170
      %p172 = scmp.ne.s32.totalorder %s161, %s164
      %p173 = scmp.eq.s32.totalorder %s25, 1
      %p174 = por %p172, %p173
      %p175 = scmp.ne.s32.totalorder %s164, %s165
      %p176 = scmp.eq.s32.totalorder %s25, 0
      %p177 = por %p175, %p176
      %p178 = scmp.ne.s32.totalorder %s164, %s165
      %p179 = scmp.eq.s32.totalorder %s26, 1
      %p180 = por %p178, %p179
      %p182 = scmp.ne.s32.totalorder %s165, %s181
      %p183 = scmp.eq.s32.totalorder %s26, 0
      %p184 = por %p182, %p183
      %s185 = ssub.s32 %s20, %s27
      %p186 = scmp.eq.s32.totalorder %s185, 0
      %s188 = sadd.s32 %s187, 1
      %s189 = scalar_select %p186, %s187, %s188
      %p192 = pneg %p186
      %p193 = scmp.eq.s32.totalorder %s20, 1
      %p194 = por %p192, %p193
      %p195 = scmp.ne.s32.totalorder %s187, %s190
      %p196 = scmp.eq.s32.totalorder %s20, 0
      %p197 = por %p195, %p196
      %p198 = scmp.ne.s32.totalorder %s187, %s190
      %p199 = scmp.eq.s32.totalorder %s25, 1
      %p200 = por %p198, %p199
      %p201 = scmp.ne.s32.totalorder %s190, %s191
      %p202 = scmp.eq.s32.totalorder %s25, 0
      %p203 = por %p201, %p202
      %p204 = scmp.ne.s32.totalorder %s190, %s191
      %p205 = scmp.eq.s32.totalorder %s26, 1
      %p206 = por %p204, %p205
      %p208 = scmp.ne.s32.totalorder %s191, %s207
      %p209 = scmp.eq.s32.totalorder %s26, 0
      %p210 = por %p208, %p209
      %p211 = scmp.le.s32.totalorder 1, %s20
      %p212 = scmp.lt.s32.totalorder %s20, 3
      %p213 = pnand %p211, %p212
      %p214 = pneg %p213
      // Predicated region
      $region9: #{tpu_custom_call.1} parent=5 // pred_check
        _
      $region10: #{tpu_custom_call.1} parent=5 // pred_check_branch
        %216 = sbr.rel (%p213) target = $region12
      $region11: #{tpu_custom_call.1} parent=5 // pred_region
        %s217 = ssub.s32 %s20, 1
        // Predicated region
        $region13: #{tpu_custom_call.1} parent=11 // pred_check
          %p218 = pneg %p67
        $region14: #{tpu_custom_call.1} parent=11 // pred_check_branch
          %220 = sbr.rel (%p218) target = $region16
        $region15: #{tpu_custom_call.1} parent=11 // pred_region
          _
        $region16: #{tpu_custom_call.1} parent=11 // pred_fallthru
          _
        // Predicated region
        $region17: #{tpu_custom_call.1} parent=11 // pred_check
          %p221 = pneg %p88
        $region18: #{tpu_custom_call.1} parent=11 // pred_check_branch
          %223 = sbr.rel (%p221) target = $region20
        $region19: #{tpu_custom_call.1} parent=11 // pred_region
          _
        $region20: #{tpu_custom_call.1} parent=11 // pred_fallthru
          _
        // Predicated region
        $region21: #{tpu_custom_call.1} parent=11 // pred_check
          %p224 = pneg %p109
        $region22: #{tpu_custom_call.1} parent=11 // pred_check_branch
          %226 = sbr.rel (%p224) target = $region24
        $region23: #{tpu_custom_call.1} parent=11 // pred_region
          _
        $region24: #{tpu_custom_call.1} parent=11 // pred_fallthru
          _
        // Predicated region
        $region25: #{tpu_custom_call.1} parent=11 // pred_check
          %p227 = pneg %p130
        $region26: #{tpu_custom_call.1} parent=11 // pred_check_branch
          %229 = sbr.rel (%p227) target = $region28
        $region27: #{tpu_custom_call.1} parent=11 // pred_region
          _
        $region28: #{tpu_custom_call.1} parent=11 // pred_fallthru
          _
        // Predicated region
        $region29: #{tpu_custom_call.1} parent=11 // pred_check
          %p230 = pneg %p151
        $region30: #{tpu_custom_call.1} parent=11 // pred_check_branch
          %232 = sbr.rel (%p230) target = $region32
        $region31: #{tpu_custom_call.1} parent=11 // pred_region
          _
        $region32: #{tpu_custom_call.1} parent=11 // pred_fallthru
          _
      $region12: #{tpu_custom_call.1} parent=5 // pred_fallthru
        _
      %p233 = scmp.lt.s32.totalorder %s20, 2
      // Predicated region
      $region33: #{tpu_custom_call.1} parent=5 // pred_check
        %p234 = pneg %p233
      $region34: #{tpu_custom_call.1} parent=5 // pred_check_branch
        %236 = sbr.rel (%p234) target = $region36
      $region35: #{tpu_custom_call.1} parent=5 // pred_region
        // Predicated region
        $region37: #{tpu_custom_call.1} parent=35 // pred_check
          %p237 = pneg %p40
        $region38: #{tpu_custom_call.1} parent=35 // pred_check_branch
          %239 = sbr.rel (%p237) target = $region40
        $region39: #{tpu_custom_call.1} parent=35 // pred_region
          %p240 = scmp.lt.s32.totalorder %s20, 1
          %s241 = scalar_select %p240, %s20, 1
          %s242 = smul.addr %s241, 8
          %s243 = scalar_lea.vmem %s0, %s242
        $region40: #{tpu_custom_call.1} parent=35 // pred_fallthru
          _
      $region36: #{tpu_custom_call.1} parent=5 // pred_fallthru
        _
      %p244 = scmp.le.s32.totalorder 1, %s20
      %p245 = scmp.lt.s32.totalorder %s20, 3
      %p246 = pnand %p244, %p245
      %p247 = pneg %p246
      // Predicated region
      $region41: #{tpu_custom_call.1} parent=5 // pred_check
        _
      $region42: #{tpu_custom_call.1} parent=5 // pred_check_branch
        %249 = sbr.rel (%p246) target = $region44
      $region43: #{tpu_custom_call.1} parent=5 // pred_region
        %s250 = ssub.s32 %s20, 1
        %p251 = scmp.lt.s32.totalorder %s25, 1
        %s252 = scalar_select %p251, %s25, 1
        %s253 = smul.addr %s252, 8
        %s254 = scalar_lea.vmem %s0, %s253
        %p255 = pneg %p46
        %p256 = pneg %p43
        %p257 = pneg %p67
        %p258 = pneg %p64
        %p259 = pneg %p88
        %p260 = pneg %p85
        %p261 = pneg %p109
        %p262 = pneg %p106
        %p263 = pneg %p130
        %p264 = pneg %p127
        %p265 = pneg %p151
        %p266 = pneg %p148
        %p267 = pneg %p177
        %p268 = pneg %p174
        %s269 = sand.u32 %s164, 1
        %s270 = scalar_lea.sflag [#allocation3], %s269
        %s271 = sand.u32 %s164, 1
        %s272 = smul.addr %s271, 8
        %s273 = scalar_lea.vmem [#allocation2], %s272
        %p274 = pneg %p203
        %p275 = pneg %p200
        %s276 = sand.u32 %s190, 1
        %s277 = scalar_lea.sflag [#allocation5], %s276
        %s278 = sand.u32 %s190, 1
        %s279 = smul.addr %s278, 8
        %s280 = scalar_lea.vmem [#allocation4], %s279
        %p281 = scmp.lt.s32.totalorder %s25, 1
        %s282 = scalar_select %p281, %s25, 1
        %s283 = smul.addr %s282, 8
        %s284 = scalar_lea.vmem %s0, %s283
        %v285 = vld [vmem:[%s284] sm:$0xff]
        %v286 = vld [vmem:[%s1] sm:$0xff]
        %v287 = vld [vmem:[%s1 + $0x8] sm:$0xff]
        %v288 = vld [vmem:[%s1 + $0x10] sm:$0xff]
        %v289 = vld [vmem:[%s1 + $0x18] sm:$0xff]
        %vm290 = vcmask 261120
        %v292 = vsel %vm290, %v285, 0
        %294 = vmatprep.subr.mxu0 0.0
        %295 = vmatpush1.msra.mxu0 0.0
        %296 = vmatprep.subr.mxu0 0.0
        %297 = vmatpush1.msra.mxu0 0.0
        %298 = vmatprep.subr.mxu0 0.0
        %299 = vmatpush1.msra.mxu0 0.0
        %300 = vmatprep.subr.mxu0 0.0
        %301 = vmatpush1.msra.mxu0 0.0
        %302 = vmatprep.subr.mxu0 0.0
        %303 = vmatpush1.msra.mxu0 0.0
        %304 = vmatprep.subr.mxu0 0.0
        %305 = vmatpush1.msra.mxu0 0.0
        %306 = vmatprep.subr.mxu0 0.0
        %307 = vmatpush1.msra.mxu0 0.0
        %308 = vmatprep.subr.mxu0 0.0
        %309 = vmatpush1.msra.mxu0 0.0
        %310 = vmatprep.subr.mxu0 0.0
        %311 = vmatpush1.msra.mxu0 0.0
        %312 = vmatprep.subr.mxu0 0.0
        %313 = vmatpush1.msra.mxu0 0.0
        %314 = vmatprep.subr.mxu0 0.0
        %315 = vmatpush1.msra.mxu0 0.0
        %316 = vmatprep.subr.mxu0 0.0
        %317 = vmatpush1.msra.mxu0 0.0
        %318 = vmatprep.subr.mxu0 0.0
        %319 = vmatpush1.msra.mxu0 %v289
        %320 = vmatprep.subr.mxu0 0.0
        %321 = vmatpush1.msra.mxu0 %v288
        %322 = vmatprep.subr.mxu0 0.0
        %323 = vmatpush1.msra.mxu0 %v287
        %324 = vmatprep.subr.mxu0 0.0
        %325 = vmatpush1.msra.mxu0 %v286
        %326 = vmatprep.subr.mxu0 0.0
        %327 = vmatpush2.msra.mxu0 0.0
        %328 = vmatprep.subr.mxu0 0.0
        %329 = vmatpush2.msra.mxu0 0.0
        %330 = vmatprep.subr.mxu0 0.0
        %331 = vmatpush2.msra.mxu0 0.0
        %332 = vmatprep.subr.mxu0 0.0
        %333 = vmatpush2.msra.mxu0 0.0
        %334 = vmatprep.subr.mxu0 0.0
        %335 = vmatpush2.msra.mxu0 0.0
        %336 = vmatprep.subr.mxu0 0.0
        %337 = vmatpush2.msra.mxu0 0.0
        %338 = vmatprep.subr.mxu0 0.0
        %339 = vmatpush2.msra.mxu0 0.0
        %340 = vmatprep.subr.mxu0 0.0
        %341 = vmatpush2.msra.mxu0 0.0
        %342 = vmatprep.subr.mxu0 0.0
        %343 = vmatpush2.msra.mxu0 0.0
        %344 = vmatprep.subr.mxu0 0.0
        %345 = vmatpush2.msra.mxu0 0.0
        %346 = vmatprep.subr.mxu0 0.0
        %347 = vmatpush2.msra.mxu0 0.0
        %348 = vmatprep.subr.mxu0 0.0
        %349 = vmatpush2.msra.mxu0 0.0
        %350 = vmatprep.subr.mxu0 0.0
        %351 = vmatpush2.msra.mxu0 0.0
        %352 = vmatprep.subr.mxu0 0.0
        %353 = vmatpush2.msra.mxu0 0.0
        %354 = vmatprep.subr.mxu0 0.0
        %355 = vmatpush2.msra.mxu0 0.0
        %356 = vmatprep.subr.mxu0 0.0
        %357 = vmatpush2.msra.mxu0 0.0
        %358 = vmatprep.mubr.f32.mxu0 0.0
        %359 = vmatmul.mubr.f32.gmra.mxu0 %v292
        %v360 = vpop.f32.mrf.mxu0
        %v361 = vadd.f32 0.0, %v360
        %v362 = vpop.f32.mrf.mxu0
        %363 = vdwg.mxu0
        %v364 = vld [vmem:[%s2] sm:$0xff]
        %v365 = vld [vmem:[%s2 + $0x8] sm:$0xff]
        %v366 = vld [vmem:[%s2 + $0x10] sm:$0xff]
        %v367 = vld [vmem:[%s2 + $0x18] sm:$0xff]
        %368 = vmatprep.subr.mxu0 0.0
        %369 = vmatpush1.msra.mxu0 0.0
        %370 = vmatprep.subr.mxu0 0.0
        %371 = vmatpush1.msra.mxu0 0.0
        %372 = vmatprep.subr.mxu0 0.0
        %373 = vmatpush1.msra.mxu0 0.0
        %374 = vmatprep.subr.mxu0 0.0
        %375 = vmatpush1.msra.mxu0 0.0
        %376 = vmatprep.subr.mxu0 0.0
        %377 = vmatpush1.msra.mxu0 0.0
        %378 = vmatprep.subr.mxu0 0.0
        %379 = vmatpush1.msra.mxu0 0.0
        %380 = vmatprep.subr.mxu0 0.0
        %381 = vmatpush1.msra.mxu0 0.0
        %382 = vmatprep.subr.mxu0 0.0
        %383 = vmatpush1.msra.mxu0 0.0
        %384 = vmatprep.subr.mxu0 0.0
        %385 = vmatpush1.msra.mxu0 0.0
        %386 = vmatprep.subr.mxu0 0.0
        %387 = vmatpush1.msra.mxu0 0.0
        %388 = vmatprep.subr.mxu0 0.0
        %389 = vmatpush1.msra.mxu0 0.0
        %390 = vmatprep.subr.mxu0 0.0
        %391 = vmatpush1.msra.mxu0 0.0
        %392 = vmatprep.subr.mxu0 0.0
        %393 = vmatpush1.msra.mxu0 %v367
        %394 = vmatprep.subr.mxu0 0.0
        %395 = vmatpush1.msra.mxu0 %v366
        %396 = vmatprep.subr.mxu0 0.0
        %397 = vmatpush1.msra.mxu0 %v365
        %398 = vmatprep.subr.mxu0 0.0
        %399 = vmatpush1.msra.mxu0 %v364
        %400 = vmatprep.subr.mxu0 0.0
        %401 = vmatpush2.msra.mxu0 0.0
        %402 = vmatprep.subr.mxu0 0.0
        %403 = vmatpush2.msra.mxu0 0.0
        %404 = vmatprep.subr.mxu0 0.0
        %405 = vmatpush2.msra.mxu0 0.0
        %406 = vmatprep.subr.mxu0 0.0
        %407 = vmatpush2.msra.mxu0 0.0
        %408 = vmatprep.subr.mxu0 0.0
        %409 = vmatpush2.msra.mxu0 0.0
        %410 = vmatprep.subr.mxu0 0.0
        %411 = vmatpush2.msra.mxu0 0.0
        %412 = vmatprep.subr.mxu0 0.0
        %413 = vmatpush2.msra.mxu0 0.0
        %414 = vmatprep.subr.mxu0 0.0
        %415 = vmatpush2.msra.mxu0 0.0
        %416 = vmatprep.subr.mxu0 0.0
        %417 = vmatpush2.msra.mxu0 0.0
        %418 = vmatprep.subr.mxu0 0.0
        %419 = vmatpush2.msra.mxu0 0.0
        %420 = vmatprep.subr.mxu0 0.0
        %421 = vmatpush2.msra.mxu0 0.0
        %422 = vmatprep.subr.mxu0 0.0
        %423 = vmatpush2.msra.mxu0 0.0
        %424 = vmatprep.subr.mxu0 0.0
        %425 = vmatpush2.msra.mxu0 0.0
        %426 = vmatprep.subr.mxu0 0.0
        %427 = vmatpush2.msra.mxu0 0.0
        %428 = vmatprep.subr.mxu0 0.0
        %429 = vmatpush2.msra.mxu0 0.0
        %430 = vmatprep.subr.mxu0 0.0
        %431 = vmatpush2.msra.mxu0 0.0
        %432 = vmatprep.mubr.f32.mxu0 0.0
        %433 = vmatmul.mubr.f32.gmra.mxu0 %v292
        %v434 = vpop.f32.mrf.mxu0
        %v435 = vadd.f32 0.0, %v434
        %v436 = vpop.f32.mrf.mxu0
        %437 = vdwg.mxu0
        %v438 = vld [vmem:[%s3] sm:$0xff]
        %v439 = vld [vmem:[%s3 + $0x8] sm:$0xff]
        %v440 = vld [vmem:[%s3 + $0x10] sm:$0xff]
        %v441 = vld [vmem:[%s3 + $0x18] sm:$0xff]
        %442 = vmatprep.subr.mxu0 0.0
        %443 = vmatpush1.msra.mxu0 0.0
        %444 = vmatprep.subr.mxu0 0.0
        %445 = vmatpush1.msra.mxu0 0.0
        %446 = vmatprep.subr.mxu0 0.0
        %447 = vmatpush1.msra.mxu0 0.0
        %448 = vmatprep.subr.mxu0 0.0
        %449 = vmatpush1.msra.mxu0 0.0
        %450 = vmatprep.subr.mxu0 0.0
        %451 = vmatpush1.msra.mxu0 0.0
        %452 = vmatprep.subr.mxu0 0.0
        %453 = vmatpush1.msra.mxu0 0.0
        %454 = vmatprep.subr.mxu0 0.0
        %455 = vmatpush1.msra.mxu0 0.0
        %456 = vmatprep.subr.mxu0 0.0
        %457 = vmatpush1.msra.mxu0 0.0
        %458 = vmatprep.subr.mxu0 0.0
        %459 = vmatpush1.msra.mxu0 0.0
        %460 = vmatprep.subr.mxu0 0.0
        %461 = vmatpush1.msra.mxu0 0.0
        %462 = vmatprep.subr.mxu0 0.0
        %463 = vmatpush1.msra.mxu0 0.0
        %464 = vmatprep.subr.mxu0 0.0
        %465 = vmatpush1.msra.mxu0 0.0
        %466 = vmatprep.subr.mxu0 0.0
        %467 = vmatpush1.msra.mxu0 %v441
        %468 = vmatprep.subr.mxu0 0.0
        %469 = vmatpush1.msra.mxu0 %v440
        %470 = vmatprep.subr.mxu0 0.0
        %471 = vmatpush1.msra.mxu0 %v439
        %472 = vmatprep.subr.mxu0 0.0
        %473 = vmatpush1.msra.mxu0 %v438
        %474 = vmatprep.subr.mxu0 0.0
        %475 = vmatpush2.msra.mxu0 0.0
        %476 = vmatprep.subr.mxu0 0.0
        %477 = vmatpush2.msra.mxu0 0.0
        %478 = vmatprep.subr.mxu0 0.0
        %479 = vmatpush2.msra.mxu0 0.0
        %480 = vmatprep.subr.mxu0 0.0
        %481 = vmatpush2.msra.mxu0 0.0
        %482 = vmatprep.subr.mxu0 0.0
        %483 = vmatpush2.msra.mxu0 0.0
        %484 = vmatprep.subr.mxu0 0.0
        %485 = vmatpush2.msra.mxu0 0.0
        %486 = vmatprep.subr.mxu0 0.0
        %487 = vmatpush2.msra.mxu0 0.0
        %488 = vmatprep.subr.mxu0 0.0
        %489 = vmatpush2.msra.mxu0 0.0
        %490 = vmatprep.subr.mxu0 0.0
        %491 = vmatpush2.msra.mxu0 0.0
        %492 = vmatprep.subr.mxu0 0.0
        %493 = vmatpush2.msra.mxu0 0.0
        %494 = vmatprep.subr.mxu0 0.0
        %495 = vmatpush2.msra.mxu0 0.0
        %496 = vmatprep.subr.mxu0 0.0
        %497 = vmatpush2.msra.mxu0 0.0
        %498 = vmatprep.subr.mxu0 0.0
        %499 = vmatpush2.msra.mxu0 0.0
        %500 = vmatprep.subr.mxu0 0.0
        %501 = vmatpush2.msra.mxu0 0.0
        %502 = vmatprep.subr.mxu0 0.0
        %503 = vmatpush2.msra.mxu0 0.0
        %504 = vmatprep.subr.mxu0 0.0
        %505 = vmatpush2.msra.mxu0 0.0
        %506 = vmatprep.mubr.f32.mxu0 0.0
        %507 = vmatmul.mubr.f32.gmra.mxu0 %v292
        %v508 = vpop.f32.mrf.mxu0
        %v509 = vadd.f32 0.0, %v508
        %v510 = vpop.f32.mrf.mxu0
        %511 = vdwg.mxu0
        %v512 = vmul.f32 %v361, 0.17677669
        %v514 = vsel %vm290, %v512, 0
        %v517 = vsel %vm290, %v435, 0
        %519 = vmatprep.subr.mxu0 0.0
        %520 = vmatpush1.xpose.msra.mxu0 0.0
        %521 = vmatprep.subr.mxu0 0.0
        %522 = vmatpush1.xpose.msra.mxu0 0.0
        %523 = vmatprep.subr.mxu0 0.0
        %524 = vmatpush1.xpose.msra.mxu0 0.0
        %525 = vmatprep.subr.mxu0 0.0
        %526 = vmatpush1.xpose.msra.mxu0 0.0
        %527 = vmatprep.subr.mxu0 0.0
        %528 = vmatpush1.xpose.msra.mxu0 0.0
        %529 = vmatprep.subr.mxu0 0.0
        %530 = vmatpush1.xpose.msra.mxu0 0.0
        %531 = vmatprep.subr.mxu0 0.0
        %532 = vmatpush1.xpose.msra.mxu0 0.0
        %533 = vmatprep.subr.mxu0 0.0
        %534 = vmatpush1.xpose.msra.mxu0 0.0
        %535 = vmatprep.subr.mxu0 0.0
        %536 = vmatpush1.xpose.msra.mxu0 0.0
        %537 = vmatprep.subr.mxu0 0.0
        %538 = vmatpush1.xpose.msra.mxu0 0.0
        %539 = vmatprep.subr.mxu0 0.0
        %540 = vmatpush1.xpose.msra.mxu0 0.0
        %541 = vmatprep.subr.mxu0 0.0
        %542 = vmatpush1.xpose.msra.mxu0 0.0
        %543 = vmatprep.subr.mxu0 0.0
        %544 = vmatpush1.xpose.msra.mxu0 0.0
        %545 = vmatprep.subr.mxu0 0.0
        %546 = vmatpush1.xpose.msra.mxu0 0.0
        %547 = vmatprep.subr.mxu0 0.0
        %548 = vmatpush1.xpose.msra.mxu0 0.0
        %549 = vmatprep.subr.mxu0 0.0
        %550 = vmatpush1.xpose.msra.mxu0 %v517
        %551 = vmatprep.subr.mxu0 0.0
        %552 = vmatpush2.xpose.msra.mxu0 0.0
        %553 = vmatprep.subr.mxu0 0.0
        %554 = vmatpush2.xpose.msra.mxu0 0.0
        %555 = vmatprep.subr.mxu0 0.0
        %556 = vmatpush2.xpose.msra.mxu0 0.0
        %557 = vmatprep.subr.mxu0 0.0
        %558 = vmatpush2.xpose.msra.mxu0 0.0
        %559 = vmatprep.subr.mxu0 0.0
        %560 = vmatpush2.xpose.msra.mxu0 0.0
        %561 = vmatprep.subr.mxu0 0.0
        %562 = vmatpush2.xpose.msra.mxu0 0.0
        %563 = vmatprep.subr.mxu0 0.0
        %564 = vmatpush2.xpose.msra.mxu0 0.0
        %565 = vmatprep.subr.mxu0 0.0
        %566 = vmatpush2.xpose.msra.mxu0 0.0
        %567 = vmatprep.subr.mxu0 0.0
        %568 = vmatpush2.xpose.msra.mxu0 0.0
        %569 = vmatprep.subr.mxu0 0.0
        %570 = vmatpush2.xpose.msra.mxu0 0.0
        %571 = vmatprep.subr.mxu0 0.0
        %572 = vmatpush2.xpose.msra.mxu0 0.0
        %573 = vmatprep.subr.mxu0 0.0
        %574 = vmatpush2.xpose.msra.mxu0 0.0
        %575 = vmatprep.subr.mxu0 0.0
        %576 = vmatpush2.xpose.msra.mxu0 0.0
        %577 = vmatprep.subr.mxu0 0.0
        %578 = vmatpush2.xpose.msra.mxu0 0.0
        %579 = vmatprep.subr.mxu0 0.0
        %580 = vmatpush2.xpose.msra.mxu0 0.0
        %581 = vmatprep.subr.mxu0 0.0
        %582 = vmatpush2.xpose.msra.mxu0 0.0
        %583 = vmatprep.mubr.f32.mxu0 0.0
        %584 = vmatmul.mubr.f32.gmra.mxu0 %v514
        %v585 = vpop.f32.mrf.mxu0
        %v586 = vadd.f32 0.0, %v585
        %v587 = vpop.f32.mrf.mxu0
        %588 = vdwg.mxu0
        %vm589 = vcmask 64512
        %v590 = vsel %vm589, %v586, -inf
        %591 = vmax.xlane.f32.xlu0 %v590
        %v592 = vpop.xlane.xlu0 %591
        %v593 = vsub.f32 %v586, %v592
        %v594 = vmul.f32 %v593, 1.442695
        %v595 = vpow.pop %v594
        %v596 = vsel %vm589, %v595, 0.0
        %597 = vadd.xlane.f32.xlu0 %v596
        %v598 = vpop.xlane.xlu0 %597
        %v599 = vrcp.pop %v598
        %v600 = vmul.f32 %v595, %v599
        %v601 = vadd.f32 %v600, 0.0
        %v603 = vsel %vm589, %v600, 0
        %605 = vmatprep.subr.mxu0 0.0
        %606 = vmatpush1.msra.mxu0 0.0
        %607 = vmatprep.subr.mxu0 0.0
        %608 = vmatpush1.msra.mxu0 0.0
        %609 = vmatprep.subr.mxu0 0.0
        %610 = vmatpush1.msra.mxu0 0.0
        %611 = vmatprep.subr.mxu0 0.0
        %612 = vmatpush1.msra.mxu0 0.0
        %613 = vmatprep.subr.mxu0 0.0
        %614 = vmatpush1.msra.mxu0 0.0
        %615 = vmatprep.subr.mxu0 0.0
        %616 = vmatpush1.msra.mxu0 0.0
        %617 = vmatprep.subr.mxu0 0.0
        %618 = vmatpush1.msra.mxu0 0.0
        %619 = vmatprep.subr.mxu0 0.0
        %620 = vmatpush1.msra.mxu0 0.0
        %621 = vmatprep.subr.mxu0 0.0
        %622 = vmatpush1.msra.mxu0 0.0
        %623 = vmatprep.subr.mxu0 0.0
        %624 = vmatpush1.msra.mxu0 0.0
        %625 = vmatprep.subr.mxu0 0.0
        %626 = vmatpush1.msra.mxu0 0.0
        %627 = vmatprep.subr.mxu0 0.0
        %628 = vmatpush1.msra.mxu0 0.0
        %629 = vmatprep.subr.mxu0 0.0
        %630 = vmatpush1.msra.mxu0 0.0
        %631 = vmatprep.subr.mxu0 0.0
        %632 = vmatpush1.msra.mxu0 0.0
        %633 = vmatprep.subr.mxu0 0.0
        %634 = vmatpush1.msra.mxu0 0.0
        %635 = vmatprep.subr.mxu0 0.0
        %636 = vmatpush1.msra.mxu0 %v509
        %637 = vmatprep.subr.mxu0 0.0
        %638 = vmatpush2.msra.mxu0 0.0
        %639 = vmatprep.subr.mxu0 0.0
        %640 = vmatpush2.msra.mxu0 0.0
        %641 = vmatprep.subr.mxu0 0.0
        %642 = vmatpush2.msra.mxu0 0.0
        %643 = vmatprep.subr.mxu0 0.0
        %644 = vmatpush2.msra.mxu0 0.0
        %645 = vmatprep.subr.mxu0 0.0
        %646 = vmatpush2.msra.mxu0 0.0
        %647 = vmatprep.subr.mxu0 0.0
        %648 = vmatpush2.msra.mxu0 0.0
        %649 = vmatprep.subr.mxu0 0.0
        %650 = vmatpush2.msra.mxu0 0.0
        %651 = vmatprep.subr.mxu0 0.0
        %652 = vmatpush2.msra.mxu0 0.0
        %653 = vmatprep.subr.mxu0 0.0
        %654 = vmatpush2.msra.mxu0 0.0
        %655 = vmatprep.subr.mxu0 0.0
        %656 = vmatpush2.msra.mxu0 0.0
        %657 = vmatprep.subr.mxu0 0.0
        %658 = vmatpush2.msra.mxu0 0.0
        %659 = vmatprep.subr.mxu0 0.0
        %660 = vmatpush2.msra.mxu0 0.0
        %661 = vmatprep.subr.mxu0 0.0
        %662 = vmatpush2.msra.mxu0 0.0
        %663 = vmatprep.subr.mxu0 0.0
        %664 = vmatpush2.msra.mxu0 0.0
        %665 = vmatprep.subr.mxu0 0.0
        %666 = vmatpush2.msra.mxu0 0.0
        %667 = vmatprep.subr.mxu0 0.0
        %668 = vmatpush2.msra.mxu0 0.0
        %669 = vmatprep.mubr.f32.mxu0 0.0
        %670 = vmatmul.mubr.f32.gmra.mxu0 %v603
        %v671 = vpop.f32.mrf.mxu0
        %v672 = vadd.f32 0.0, %v671
        %v673 = vpop.f32.mrf.mxu0
        %674 = vdwg.mxu0
        %675 = vrot.lane.b32.xlu0 %v512, 96
        %v676 = vpop.permute.xlu0 %675
        %677 = vrot.lane.b32.xlu0 %v435, 96
        %v678 = vpop.permute.xlu0 %677
        %v679 = vsel %vm290, %v676, 0
        %v681 = vsel %vm290, %v678, 0
        %683 = vmatprep.subr.mxu0 0.0
        %684 = vmatpush1.xpose.msra.mxu0 0.0
        %685 = vmatprep.subr.mxu0 0.0
        %686 = vmatpush1.xpose.msra.mxu0 0.0
        %687 = vmatprep.subr.mxu0 0.0
        %688 = vmatpush1.xpose.msra.mxu0 0.0
        %689 = vmatprep.subr.mxu0 0.0
        %690 = vmatpush1.xpose.msra.mxu0 0.0
        %691 = vmatprep.subr.mxu0 0.0
        %692 = vmatpush1.xpose.msra.mxu0 0.0
        %693 = vmatprep.subr.mxu0 0.0
        %694 = vmatpush1.xpose.msra.mxu0 0.0
        %695 = vmatprep.subr.mxu0 0.0
        %696 = vmatpush1.xpose.msra.mxu0 0.0
        %697 = vmatprep.subr.mxu0 0.0
        %698 = vmatpush1.xpose.msra.mxu0 0.0
        %699 = vmatprep.subr.mxu0 0.0
        %700 = vmatpush1.xpose.msra.mxu0 0.0
        %701 = vmatprep.subr.mxu0 0.0
        %702 = vmatpush1.xpose.msra.mxu0 0.0
        %703 = vmatprep.subr.mxu0 0.0
        %704 = vmatpush1.xpose.msra.mxu0 0.0
        %705 = vmatprep.subr.mxu0 0.0
        %706 = vmatpush1.xpose.msra.mxu0 0.0
        %707 = vmatprep.subr.mxu0 0.0
        %708 = vmatpush1.xpose.msra.mxu0 0.0
        %709 = vmatprep.subr.mxu0 0.0
        %710 = vmatpush1.xpose.msra.mxu0 0.0
        %711 = vmatprep.subr.mxu0 0.0
        %712 = vmatpush1.xpose.msra.mxu0 0.0
        %713 = vmatprep.subr.mxu0 0.0
        %714 = vmatpush1.xpose.msra.mxu0 %v681
        %715 = vmatprep.subr.mxu0 0.0
        %716 = vmatpush2.xpose.msra.mxu0 0.0
        %717 = vmatprep.subr.mxu0 0.0
        %718 = vmatpush2.xpose.msra.mxu0 0.0
        %719 = vmatprep.subr.mxu0 0.0
        %720 = vmatpush2.xpose.msra.mxu0 0.0
        %721 = vmatprep.subr.mxu0 0.0
        %722 = vmatpush2.xpose.msra.mxu0 0.0
        %723 = vmatprep.subr.mxu0 0.0
        %724 = vmatpush2.xpose.msra.mxu0 0.0
        %725 = vmatprep.subr.mxu0 0.0
        %726 = vmatpush2.xpose.msra.mxu0 0.0
        %727 = vmatprep.subr.mxu0 0.0
        %728 = vmatpush2.xpose.msra.mxu0 0.0
        %729 = vmatprep.subr.mxu0 0.0
        %730 = vmatpush2.xpose.msra.mxu0 0.0
        %731 = vmatprep.subr.mxu0 0.0
        %732 = vmatpush2.xpose.msra.mxu0 0.0
        %733 = vmatprep.subr.mxu0 0.0
        %734 = vmatpush2.xpose.msra.mxu0 0.0
        %735 = vmatprep.subr.mxu0 0.0
        %736 = vmatpush2.xpose.msra.mxu0 0.0
        %737 = vmatprep.subr.mxu0 0.0
        %738 = vmatpush2.xpose.msra.mxu0 0.0
        %739 = vmatprep.subr.mxu0 0.0
        %740 = vmatpush2.xpose.msra.mxu0 0.0
        %741 = vmatprep.subr.mxu0 0.0
        %742 = vmatpush2.xpose.msra.mxu0 0.0
        %743 = vmatprep.subr.mxu0 0.0
        %744 = vmatpush2.xpose.msra.mxu0 0.0
        %745 = vmatprep.subr.mxu0 0.0
        %746 = vmatpush2.xpose.msra.mxu0 0.0
        %747 = vmatprep.mubr.f32.mxu0 0.0
        %748 = vmatmul.mubr.f32.gmra.mxu0 %v679
        %v749 = vpop.f32.mrf.mxu0
        %v750 = vadd.f32 0.0, %v749
        %v751 = vpop.f32.mrf.mxu0
        %752 = vdwg.mxu0
        %v753 = vsel %vm589, %v750, -inf
        %754 = vmax.xlane.f32.xlu0 %v753
        %v755 = vpop.xlane.xlu0 %754
        %v756 = vsub.f32 %v750, %v755
        %v757 = vmul.f32 %v756, 1.442695
        %v758 = vpow.pop %v757
        %v759 = vsel %vm589, %v758, 0.0
        %760 = vadd.xlane.f32.xlu0 %v759
        %v761 = vpop.xlane.xlu0 %760
        %v762 = vrcp.pop %v761
        %v763 = vmul.f32 %v758, %v762
        %v764 = vadd.f32 %v601, %v763
        %766 = vrot.lane.b32.xlu0 %v509, 96
        %v767 = vpop.permute.xlu0 %766
        %v770 = vsel %vm589, %v763, 0
        %772 = vmatprep.subr.mxu0 0.0
        %773 = vmatpush1.msra.mxu0 0.0
        %774 = vmatprep.subr.mxu0 0.0
        %775 = vmatpush1.msra.mxu0 0.0
        %776 = vmatprep.subr.mxu0 0.0
        %777 = vmatpush1.msra.mxu0 0.0
        %778 = vmatprep.subr.mxu0 0.0
        %779 = vmatpush1.msra.mxu0 0.0
        %780 = vmatprep.subr.mxu0 0.0
        %781 = vmatpush1.msra.mxu0 0.0
        %782 = vmatprep.subr.mxu0 0.0
        %783 = vmatpush1.msra.mxu0 0.0
        %784 = vmatprep.subr.mxu0 0.0
        %785 = vmatpush1.msra.mxu0 0.0
        %786 = vmatprep.subr.mxu0 0.0
        %787 = vmatpush1.msra.mxu0 0.0
        %788 = vmatprep.subr.mxu0 0.0
        %789 = vmatpush1.msra.mxu0 0.0
        %790 = vmatprep.subr.mxu0 0.0
        %791 = vmatpush1.msra.mxu0 0.0
        %792 = vmatprep.subr.mxu0 0.0
        %793 = vmatpush1.msra.mxu0 0.0
        %794 = vmatprep.subr.mxu0 0.0
        %795 = vmatpush1.msra.mxu0 0.0
        %796 = vmatprep.subr.mxu0 0.0
        %797 = vmatpush1.msra.mxu0 0.0
        %798 = vmatprep.subr.mxu0 0.0
        %799 = vmatpush1.msra.mxu0 0.0
        %800 = vmatprep.subr.mxu0 0.0
        %801 = vmatpush1.msra.mxu0 0.0
        %802 = vmatprep.subr.mxu0 0.0
        %803 = vmatpush1.msra.mxu0 %v767
        %804 = vmatprep.subr.mxu0 0.0
        %805 = vmatpush2.msra.mxu0 0.0
        %806 = vmatprep.subr.mxu0 0.0
        %807 = vmatpush2.msra.mxu0 0.0
        %808 = vmatprep.subr.mxu0 0.0
        %809 = vmatpush2.msra.mxu0 0.0
        %810 = vmatprep.subr.mxu0 0.0
        %811 = vmatpush2.msra.mxu0 0.0
        %812 = vmatprep.subr.mxu0 0.0
        %813 = vmatpush2.msra.mxu0 0.0
        %814 = vmatprep.subr.mxu0 0.0
        %815 = vmatpush2.msra.mxu0 0.0
        %816 = vmatprep.subr.mxu0 0.0
        %817 = vmatpush2.msra.mxu0 0.0
        %818 = vmatprep.subr.mxu0 0.0
        %819 = vmatpush2.msra.mxu0 0.0
        %820 = vmatprep.subr.mxu0 0.0
        %821 = vmatpush2.msra.mxu0 0.0
        %822 = vmatprep.subr.mxu0 0.0
        %823 = vmatpush2.msra.mxu0 0.0
        %824 = vmatprep.subr.mxu0 0.0
        %825 = vmatpush2.msra.mxu0 0.0
        %826 = vmatprep.subr.mxu0 0.0
        %827 = vmatpush2.msra.mxu0 0.0
        %828 = vmatprep.subr.mxu0 0.0
        %829 = vmatpush2.msra.mxu0 0.0
        %830 = vmatprep.subr.mxu0 0.0
        %831 = vmatpush2.msra.mxu0 0.0
        %832 = vmatprep.subr.mxu0 0.0
        %833 = vmatpush2.msra.mxu0 0.0
        %834 = vmatprep.subr.mxu0 0.0
        %835 = vmatpush2.msra.mxu0 0.0
        %836 = vmatprep.mubr.f32.mxu0 0.0
        %837 = vmatmul.mubr.f32.gmra.mxu0 %v770
        %v838 = vpop.f32.mrf.mxu0
        %v839 = vadd.f32 0.0, %v838
        %v840 = vpop.f32.mrf.mxu0
        %841 = vdwg.mxu0
        %842 = vrot.lane.b32.xlu0 %v512, 64
        %v843 = vpop.permute.xlu0 %842
        %844 = vrot.lane.b32.xlu0 %v435, 64
        %v845 = vpop.permute.xlu0 %844
        %v846 = vsel %vm290, %v843, 0
        %v848 = vsel %vm290, %v845, 0
        %850 = vmatprep.subr.mxu0 0.0
        %851 = vmatpush1.xpose.msra.mxu0 0.0
        %852 = vmatprep.subr.mxu0 0.0
        %853 = vmatpush1.xpose.msra.mxu0 0.0
        %854 = vmatprep.subr.mxu0 0.0
        %855 = vmatpush1.xpose.msra.mxu0 0.0
        %856 = vmatprep.subr.mxu0 0.0
        %857 = vmatpush1.xpose.msra.mxu0 0.0
        %858 = vmatprep.subr.mxu0 0.0
        %859 = vmatpush1.xpose.msra.mxu0 0.0
        %860 = vmatprep.subr.mxu0 0.0
        %861 = vmatpush1.xpose.msra.mxu0 0.0
        %862 = vmatprep.subr.mxu0 0.0
        %863 = vmatpush1.xpose.msra.mxu0 0.0
        %864 = vmatprep.subr.mxu0 0.0
        %865 = vmatpush1.xpose.msra.mxu0 0.0
        %866 = vmatprep.subr.mxu0 0.0
        %867 = vmatpush1.xpose.msra.mxu0 0.0
        %868 = vmatprep.subr.mxu0 0.0
        %869 = vmatpush1.xpose.msra.mxu0 0.0
        %870 = vmatprep.subr.mxu0 0.0
        %871 = vmatpush1.xpose.msra.mxu0 0.0
        %872 = vmatprep.subr.mxu0 0.0
        %873 = vmatpush1.xpose.msra.mxu0 0.0
        %874 = vmatprep.subr.mxu0 0.0
        %875 = vmatpush1.xpose.msra.mxu0 0.0
        %876 = vmatprep.subr.mxu0 0.0
        %877 = vmatpush1.xpose.msra.mxu0 0.0
        %878 = vmatprep.subr.mxu0 0.0
        %879 = vmatpush1.xpose.msra.mxu0 0.0
        %880 = vmatprep.subr.mxu0 0.0
        %881 = vmatpush1.xpose.msra.mxu0 %v848
        %882 = vmatprep.subr.mxu0 0.0
        %883 = vmatpush2.xpose.msra.mxu0 0.0
        %884 = vmatprep.subr.mxu0 0.0
        %885 = vmatpush2.xpose.msra.mxu0 0.0
        %886 = vmatprep.subr.mxu0 0.0
        %887 = vmatpush2.xpose.msra.mxu0 0.0
        %888 = vmatprep.subr.mxu0 0.0
        %889 = vmatpush2.xpose.msra.mxu0 0.0
        %890 = vmatprep.subr.mxu0 0.0
        %891 = vmatpush2.xpose.msra.mxu0 0.0
        %892 = vmatprep.subr.mxu0 0.0
        %893 = vmatpush2.xpose.msra.mxu0 0.0
        %894 = vmatprep.subr.mxu0 0.0
        %895 = vmatpush2.xpose.msra.mxu0 0.0
        %896 = vmatprep.subr.mxu0 0.0
        %897 = vmatpush2.xpose.msra.mxu0 0.0
        %898 = vmatprep.subr.mxu0 0.0
        %899 = vmatpush2.xpose.msra.mxu0 0.0
        %900 = vmatprep.subr.mxu0 0.0
        %901 = vmatpush2.xpose.msra.mxu0 0.0
        %902 = vmatprep.subr.mxu0 0.0
        %903 = vmatpush2.xpose.msra.mxu0 0.0
        %904 = vmatprep.subr.mxu0 0.0
        %905 = vmatpush2.xpose.msra.mxu0 0.0
        %906 = vmatprep.subr.mxu0 0.0
        %907 = vmatpush2.xpose.msra.mxu0 0.0
        %908 = vmatprep.subr.mxu0 0.0
        %909 = vmatpush2.xpose.msra.mxu0 0.0
        %910 = vmatprep.subr.mxu0 0.0
        %911 = vmatpush2.xpose.msra.mxu0 0.0
        %912 = vmatprep.subr.mxu0 0.0
        %913 = vmatpush2.xpose.msra.mxu0 0.0
        %914 = vmatprep.mubr.f32.mxu0 0.0
        %915 = vmatmul.mubr.f32.gmra.mxu0 %v846
        %v916 = vpop.f32.mrf.mxu0
        %v917 = vadd.f32 0.0, %v916
        %v918 = vpop.f32.mrf.mxu0
        %919 = vdwg.mxu0
        %v920 = vsel %vm589, %v917, -inf
        %921 = vmax.xlane.f32.xlu0 %v920
        %v922 = vpop.xlane.xlu0 %921
        %v923 = vsub.f32 %v917, %v922
        %v924 = vmul.f32 %v923, 1.442695
        %v925 = vpow.pop %v924
        %v926 = vsel %vm589, %v925, 0.0
        %927 = vadd.xlane.f32.xlu0 %v926
        %v928 = vpop.xlane.xlu0 %927
        %v929 = vrcp.pop %v928
        %v930 = vmul.f32 %v925, %v929
        %v931 = vadd.f32 %v764, %v930
        %932 = vrot.lane.b32.xlu0 %v509, 64
        %v933 = vpop.permute.xlu0 %932
        %v936 = vsel %vm589, %v930, 0
        %938 = vmatprep.subr.mxu0 0.0
        %939 = vmatpush1.msra.mxu0 0.0
        %940 = vmatprep.subr.mxu0 0.0
        %941 = vmatpush1.msra.mxu0 0.0
        %942 = vmatprep.subr.mxu0 0.0
        %943 = vmatpush1.msra.mxu0 0.0
        %944 = vmatprep.subr.mxu0 0.0
        %945 = vmatpush1.msra.mxu0 0.0
        %946 = vmatprep.subr.mxu0 0.0
        %947 = vmatpush1.msra.mxu0 0.0
        %948 = vmatprep.subr.mxu0 0.0
        %949 = vmatpush1.msra.mxu0 0.0
        %950 = vmatprep.subr.mxu0 0.0
        %951 = vmatpush1.msra.mxu0 0.0
        %952 = vmatprep.subr.mxu0 0.0
        %953 = vmatpush1.msra.mxu0 0.0
        %954 = vmatprep.subr.mxu0 0.0
        %955 = vmatpush1.msra.mxu0 0.0
        %956 = vmatprep.subr.mxu0 0.0
        %957 = vmatpush1.msra.mxu0 0.0
        %958 = vmatprep.subr.mxu0 0.0
        %959 = vmatpush1.msra.mxu0 0.0
        %960 = vmatprep.subr.mxu0 0.0
        %961 = vmatpush1.msra.mxu0 0.0
        %962 = vmatprep.subr.mxu0 0.0
        %963 = vmatpush1.msra.mxu0 0.0
        %964 = vmatprep.subr.mxu0 0.0
        %965 = vmatpush1.msra.mxu0 0.0
        %966 = vmatprep.subr.mxu0 0.0
        %967 = vmatpush1.msra.mxu0 0.0
        %968 = vmatprep.subr.mxu0 0.0
        %969 = vmatpush1.msra.mxu0 %v933
        %970 = vmatprep.subr.mxu0 0.0
        %971 = vmatpush2.msra.mxu0 0.0
        %972 = vmatprep.subr.mxu0 0.0
        %973 = vmatpush2.msra.mxu0 0.0
        %974 = vmatprep.subr.mxu0 0.0
        %975 = vmatpush2.msra.mxu0 0.0
        %976 = vmatprep.subr.mxu0 0.0
        %977 = vmatpush2.msra.mxu0 0.0
        %978 = vmatprep.subr.mxu0 0.0
        %979 = vmatpush2.msra.mxu0 0.0
        %980 = vmatprep.subr.mxu0 0.0
        %981 = vmatpush2.msra.mxu0 0.0
        %982 = vmatprep.subr.mxu0 0.0
        %983 = vmatpush2.msra.mxu0 0.0
        %984 = vmatprep.subr.mxu0 0.0
        %985 = vmatpush2.msra.mxu0 0.0
        %986 = vmatprep.subr.mxu0 0.0
        %987 = vmatpush2.msra.mxu0 0.0
        %988 = vmatprep.subr.mxu0 0.0
        %989 = vmatpush2.msra.mxu0 0.0
        %990 = vmatprep.subr.mxu0 0.0
        %991 = vmatpush2.msra.mxu0 0.0
        %992 = vmatprep.subr.mxu0 0.0
        %993 = vmatpush2.msra.mxu0 0.0
        %994 = vmatprep.subr.mxu0 0.0
        %995 = vmatpush2.msra.mxu0 0.0
        %996 = vmatprep.subr.mxu0 0.0
        %997 = vmatpush2.msra.mxu0 0.0
        %998 = vmatprep.subr.mxu0 0.0
        %999 = vmatpush2.msra.mxu0 0.0
        %1000 = vmatprep.subr.mxu0 0.0
        %1001 = vmatpush2.msra.mxu0 0.0
        %1002 = vmatprep.mubr.f32.mxu0 0.0
        %1003 = vmatmul.mubr.f32.gmra.mxu0 %v936
        %v1004 = vpop.f32.mrf.mxu0
        %v1005 = vadd.f32 0.0, %v1004
        %v1006 = vpop.f32.mrf.mxu0
        %1007 = vdwg.mxu0
        %1008 = vrot.lane.b32.xlu0 %v512, 32
        %v1009 = vpop.permute.xlu0 %1008
        %1010 = vrot.lane.b32.xlu0 %v435, 32
        %v1011 = vpop.permute.xlu0 %1010
        %v1012 = vsel %vm290, %v1009, 0
        %v1014 = vsel %vm290, %v1011, 0
        %1016 = vmatprep.subr.mxu0 0.0
        %1017 = vmatpush1.xpose.msra.mxu0 0.0
        %1018 = vmatprep.subr.mxu0 0.0
        %1019 = vmatpush1.xpose.msra.mxu0 0.0
        %1020 = vmatprep.subr.mxu0 0.0
        %1021 = vmatpush1.xpose.msra.mxu0 0.0
        %1022 = vmatprep.subr.mxu0 0.0
        %1023 = vmatpush1.xpose.msra.mxu0 0.0
        %1024 = vmatprep.subr.mxu0 0.0
        %1025 = vmatpush1.xpose.msra.mxu0 0.0
        %1026 = vmatprep.subr.mxu0 0.0
        %1027 = vmatpush1.xpose.msra.mxu0 0.0
        %1028 = vmatprep.subr.mxu0 0.0
        %1029 = vmatpush1.xpose.msra.mxu0 0.0
        %1030 = vmatprep.subr.mxu0 0.0
        %1031 = vmatpush1.xpose.msra.mxu0 0.0
        %1032 = vmatprep.subr.mxu0 0.0
        %1033 = vmatpush1.xpose.msra.mxu0 0.0
        %1034 = vmatprep.subr.mxu0 0.0
        %1035 = vmatpush1.xpose.msra.mxu0 0.0
        %1036 = vmatprep.subr.mxu0 0.0
        %1037 = vmatpush1.xpose.msra.mxu0 0.0
        %1038 = vmatprep.subr.mxu0 0.0
        %1039 = vmatpush1.xpose.msra.mxu0 0.0
        %1040 = vmatprep.subr.mxu0 0.0
        %1041 = vmatpush1.xpose.msra.mxu0 0.0
        %1042 = vmatprep.subr.mxu0 0.0
        %1043 = vmatpush1.xpose.msra.mxu0 0.0
        %1044 = vmatprep.subr.mxu0 0.0
        %1045 = vmatpush1.xpose.msra.mxu0 0.0
        %1046 = vmatprep.subr.mxu0 0.0
        %1047 = vmatpush1.xpose.msra.mxu0 %v1014
        %1048 = vmatprep.subr.mxu0 0.0
        %1049 = vmatpush2.xpose.msra.mxu0 0.0
        %1050 = vmatprep.subr.mxu0 0.0
        %1051 = vmatpush2.xpose.msra.mxu0 0.0
        %1052 = vmatprep.subr.mxu0 0.0
        %1053 = vmatpush2.xpose.msra.mxu0 0.0
        %1054 = vmatprep.subr.mxu0 0.0
        %1055 = vmatpush2.xpose.msra.mxu0 0.0
        %1056 = vmatprep.subr.mxu0 0.0
        %1057 = vmatpush2.xpose.msra.mxu0 0.0
        %1058 = vmatprep.subr.mxu0 0.0
        %1059 = vmatpush2.xpose.msra.mxu0 0.0
        %1060 = vmatprep.subr.mxu0 0.0
        %1061 = vmatpush2.xpose.msra.mxu0 0.0
        %1062 = vmatprep.subr.mxu0 0.0
        %1063 = vmatpush2.xpose.msra.mxu0 0.0
        %1064 = vmatprep.subr.mxu0 0.0
        %1065 = vmatpush2.xpose.msra.mxu0 0.0
        %1066 = vmatprep.subr.mxu0 0.0
        %1067 = vmatpush2.xpose.msra.mxu0 0.0
        %1068 = vmatprep.subr.mxu0 0.0
        %1069 = vmatpush2.xpose.msra.mxu0 0.0
        %1070 = vmatprep.subr.mxu0 0.0
        %1071 = vmatpush2.xpose.msra.mxu0 0.0
        %1072 = vmatprep.subr.mxu0 0.0
        %1073 = vmatpush2.xpose.msra.mxu0 0.0
        %1074 = vmatprep.subr.mxu0 0.0
        %1075 = vmatpush2.xpose.msra.mxu0 0.0
        %1076 = vmatprep.subr.mxu0 0.0
        %1077 = vmatpush2.xpose.msra.mxu0 0.0
        %1078 = vmatprep.subr.mxu0 0.0
        %1079 = vmatpush2.xpose.msra.mxu0 0.0
        %1080 = vmatprep.mubr.f32.mxu0 0.0
        %1081 = vmatmul.mubr.f32.gmra.mxu0 %v1012
        %v1082 = vpop.f32.mrf.mxu0
        %v1083 = vadd.f32 0.0, %v1082
        %v1084 = vpop.f32.mrf.mxu0
        %1085 = vdwg.mxu0
        %v1086 = vsel %vm589, %v1083, -inf
        %1087 = vmax.xlane.f32.xlu0 %v1086
        %v1088 = vpop.xlane.xlu0 %1087
        %v1089 = vsub.f32 %v1083, %v1088
        %v1090 = vmul.f32 %v1089, 1.442695
        %v1091 = vpow.pop %v1090
        %v1092 = vsel %vm589, %v1091, 0.0
        %1093 = vadd.xlane.f32.xlu0 %v1092
        %v1094 = vpop.xlane.xlu0 %1093
        %v1095 = vrcp.pop %v1094
        %v1096 = vmul.f32 %v1091, %v1095
        %v1097 = vadd.f32 %v931, %v1096
        %1098 = vrot.lane.b32.xlu0 %v509, 32
        %v1099 = vpop.permute.xlu0 %1098
        %v1102 = vsel %vm589, %v1096, 0
        %1104 = vmatprep.subr.mxu0 0.0
        %1105 = vmatpush1.msra.mxu0 0.0
        %1106 = vmatprep.subr.mxu0 0.0
        %1107 = vmatpush1.msra.mxu0 0.0
        %1108 = vmatprep.subr.mxu0 0.0
        %1109 = vmatpush1.msra.mxu0 0.0
        %1110 = vmatprep.subr.mxu0 0.0
        %1111 = vmatpush1.msra.mxu0 0.0
        %1112 = vmatprep.subr.mxu0 0.0
        %1113 = vmatpush1.msra.mxu0 0.0
        %1114 = vmatprep.subr.mxu0 0.0
        %1115 = vmatpush1.msra.mxu0 0.0
        %1116 = vmatprep.subr.mxu0 0.0
        %1117 = vmatpush1.msra.mxu0 0.0
        %1118 = vmatprep.subr.mxu0 0.0
        %1119 = vmatpush1.msra.mxu0 0.0
        %1120 = vmatprep.subr.mxu0 0.0
        %1121 = vmatpush1.msra.mxu0 0.0
        %1122 = vmatprep.subr.mxu0 0.0
        %1123 = vmatpush1.msra.mxu0 0.0
        %1124 = vmatprep.subr.mxu0 0.0
        %1125 = vmatpush1.msra.mxu0 0.0
        %1126 = vmatprep.subr.mxu0 0.0
        %1127 = vmatpush1.msra.mxu0 0.0
        %1128 = vmatprep.subr.mxu0 0.0
        %1129 = vmatpush1.msra.mxu0 0.0
        %1130 = vmatprep.subr.mxu0 0.0
        %1131 = vmatpush1.msra.mxu0 0.0
        %1132 = vmatprep.subr.mxu0 0.0
        %1133 = vmatpush1.msra.mxu0 0.0
        %1134 = vmatprep.subr.mxu0 0.0
        %1135 = vmatpush1.msra.mxu0 %v1099
        %1136 = vmatprep.subr.mxu0 0.0
        %1137 = vmatpush2.msra.mxu0 0.0
        %1138 = vmatprep.subr.mxu0 0.0
        %1139 = vmatpush2.msra.mxu0 0.0
        %1140 = vmatprep.subr.mxu0 0.0
        %1141 = vmatpush2.msra.mxu0 0.0
        %1142 = vmatprep.subr.mxu0 0.0
        %1143 = vmatpush2.msra.mxu0 0.0
        %1144 = vmatprep.subr.mxu0 0.0
        %1145 = vmatpush2.msra.mxu0 0.0
        %1146 = vmatprep.subr.mxu0 0.0
        %1147 = vmatpush2.msra.mxu0 0.0
        %1148 = vmatprep.subr.mxu0 0.0
        %1149 = vmatpush2.msra.mxu0 0.0
        %1150 = vmatprep.subr.mxu0 0.0
        %1151 = vmatpush2.msra.mxu0 0.0
        %1152 = vmatprep.subr.mxu0 0.0
        %1153 = vmatpush2.msra.mxu0 0.0
        %1154 = vmatprep.subr.mxu0 0.0
        %1155 = vmatpush2.msra.mxu0 0.0
        %1156 = vmatprep.subr.mxu0 0.0
        %1157 = vmatpush2.msra.mxu0 0.0
        %1158 = vmatprep.subr.mxu0 0.0
        %1159 = vmatpush2.msra.mxu0 0.0
        %1160 = vmatprep.subr.mxu0 0.0
        %1161 = vmatpush2.msra.mxu0 0.0
        %1162 = vmatprep.subr.mxu0 0.0
        %1163 = vmatpush2.msra.mxu0 0.0
        %1164 = vmatprep.subr.mxu0 0.0
        %1165 = vmatpush2.msra.mxu0 0.0
        %1166 = vmatprep.subr.mxu0 0.0
        %1167 = vmatpush2.msra.mxu0 0.0
        %1168 = vmatprep.mubr.f32.mxu0 0.0
        %1169 = vmatmul.mubr.f32.gmra.mxu0 %v1102
        %v1170 = vpop.f32.mrf.mxu0
        %v1171 = vadd.f32 0.0, %v1170
        %v1172 = vpop.f32.mrf.mxu0
        %1173 = vdwg.mxu0
        %1175 = vrot.lane.b32.xlu0 %v839, 32
        %v1176 = vpop.permute.xlu0 %1175
        %1179 = vrot.lane.b32.xlu0 %v1005, 64
        %v1180 = vpop.permute.xlu0 %1179
        %1183 = vrot.lane.b32.xlu0 %v1171, 96
        %v1184 = vpop.permute.xlu0 %1183
        %v1186 = vsel %vm290, %v672, %v1176
        %vm1187 = vcmask 523264
        %v1188 = vsel %vm1187, %v1186, %v1180
        %vm1189 = vcmask 785408
        %v1190 = vsel %vm1189, %v1188, %v1184
        %v1191 = vld [vmem:[%s4] sm:$0xff]
        %v1192 = vld [vmem:[%s4 + $0x8] sm:$0xff]
        %v1193 = vld [vmem:[%s4 + $0x10] sm:$0xff]
        %v1194 = vld [vmem:[%s4 + $0x18] sm:$0xff]
        %v1195 = vld [vmem:[%s4 + $0x20] sm:$0xff]
        %v1196 = vld [vmem:[%s4 + $0x28] sm:$0xff]
        %v1197 = vld [vmem:[%s4 + $0x30] sm:$0xff]
        %v1198 = vld [vmem:[%s4 + $0x38] sm:$0xff]
        %v1199 = vld [vmem:[%s4 + $0x40] sm:$0xff]
        %v1200 = vld [vmem:[%s4 + $0x48] sm:$0xff]
        %v1201 = vld [vmem:[%s4 + $0x50] sm:$0xff]
        %v1202 = vld [vmem:[%s4 + $0x58] sm:$0xff]
        %v1203 = vld [vmem:[%s4 + $0x60] sm:$0xff]
        %v1204 = vld [vmem:[%s4 + $0x68] sm:$0xff]
        %v1205 = vld [vmem:[%s4 + $0x70] sm:$0xff]
        %v1206 = vld [vmem:[%s4 + $0x78] sm:$0xff]
        %v1207 = vld [vmem:[%s5] sm:$0x1]
        %v1209 = vlaneseq
        %v1210 = vshrl.u32 %v1209, 7
        %v1211 = vsub.s32 0, %v1210
        %v1212 = vrot.slane %v1207, %v1211
        %1214 = vmatprep.subr.mxu0 0.0
        %1215 = vmatpush1.msra.mxu0 %v1206
        %1216 = vmatprep.subr.mxu0 0.0
        %1217 = vmatpush1.msra.mxu0 %v1205
        %1218 = vmatprep.subr.mxu0 0.0
        %1219 = vmatpush1.msra.mxu0 %v1204
        %1220 = vmatprep.subr.mxu0 0.0
        %1221 = vmatpush1.msra.mxu0 %v1203
        %1222 = vmatprep.subr.mxu0 0.0
        %1223 = vmatpush1.msra.mxu0 %v1202
        %1224 = vmatprep.subr.mxu0 0.0
        %1225 = vmatpush1.msra.mxu0 %v1201
        %1226 = vmatprep.subr.mxu0 0.0
        %1227 = vmatpush1.msra.mxu0 %v1200
        %1228 = vmatprep.subr.mxu0 0.0
        %1229 = vmatpush1.msra.mxu0 %v1199
        %1230 = vmatprep.subr.mxu0 0.0
        %1231 = vmatpush1.msra.mxu0 %v1198
        %1232 = vmatprep.subr.mxu0 0.0
        %1233 = vmatpush1.msra.mxu0 %v1197
        %1234 = vmatprep.subr.mxu0 0.0
        %1235 = vmatpush1.msra.mxu0 %v1196
        %1236 = vmatprep.subr.mxu0 0.0
        %1237 = vmatpush1.msra.mxu0 %v1195
        %1238 = vmatprep.subr.mxu0 0.0
        %1239 = vmatpush1.msra.mxu0 %v1194
        %1240 = vmatprep.subr.mxu0 0.0
        %1241 = vmatpush1.msra.mxu0 %v1193
        %1242 = vmatprep.subr.mxu0 0.0
        %1243 = vmatpush1.msra.mxu0 %v1192
        %1244 = vmatprep.subr.mxu0 0.0
        %1245 = vmatpush1.msra.mxu0 %v1191
        %1246 = vmatprep.subr.mxu0 0.0
        %1247 = vmatpush2.msra.mxu0 0.0
        %1248 = vmatprep.subr.mxu0 0.0
        %1249 = vmatpush2.msra.mxu0 0.0
        %1250 = vmatprep.subr.mxu0 0.0
        %1251 = vmatpush2.msra.mxu0 0.0
        %1252 = vmatprep.subr.mxu0 0.0
        %1253 = vmatpush2.msra.mxu0 0.0
        %1254 = vmatprep.subr.mxu0 0.0
        %1255 = vmatpush2.msra.mxu0 0.0
        %1256 = vmatprep.subr.mxu0 0.0
        %1257 = vmatpush2.msra.mxu0 0.0
        %1258 = vmatprep.subr.mxu0 0.0
        %1259 = vmatpush2.msra.mxu0 0.0
        %1260 = vmatprep.subr.mxu0 0.0
        %1261 = vmatpush2.msra.mxu0 0.0
        %1262 = vmatprep.subr.mxu0 0.0
        %1263 = vmatpush2.msra.mxu0 0.0
        %1264 = vmatprep.subr.mxu0 0.0
        %1265 = vmatpush2.msra.mxu0 0.0
        %1266 = vmatprep.subr.mxu0 0.0
        %1267 = vmatpush2.msra.mxu0 0.0
        %1268 = vmatprep.subr.mxu0 0.0
        %1269 = vmatpush2.msra.mxu0 0.0
        %1270 = vmatprep.subr.mxu0 0.0
        %1271 = vmatpush2.msra.mxu0 0.0
        %1272 = vmatprep.subr.mxu0 0.0
        %1273 = vmatpush2.msra.mxu0 0.0
        %1274 = vmatprep.subr.mxu0 0.0
        %1275 = vmatpush2.msra.mxu0 0.0
        %1276 = vmatprep.subr.mxu0 0.0
        %1277 = vmatpush2.msra.mxu0 0.0
        %1278 = vmatprep.mubr.f32.mxu0 0.0
        %1279 = vmatmul.mubr.f32.gmra.mxu0 %v1190
        %v1280 = vpop.f32.mrf.mxu0
        %v1281 = vadd.f32 %v1212, %v1280
        %v1282 = vpop.f32.mrf.mxu0
        %1283 = vdwg.mxu0
        %1284 = vst.msk [vmem:[%s273] sm:$0xff] %vm290, %v1281
        %v1285 = vmul.f32 %v1097, 0.25
        %1286 = vst.msk [vmem:[%s280] sm:$0xff] %vm589, %v1285
        %s1287 = sand.u32 %s164, 1
        %s1288 = scalar_lea.sflag [#allocation3], %s1287
        %s1289 = sand.u32 %s164, 1
        %s1290 = smul.addr %s1289, 8
        %s1291 = scalar_lea.vmem [#allocation2], %s1290
        %s1292 = sand.u32 %s190, 1
        %s1293 = scalar_lea.sflag [#allocation5], %s1292
        %s1294 = sand.u32 %s190, 1
        %s1295 = smul.addr %s1294, 8
        %s1296 = scalar_lea.vmem [#allocation4], %s1295
        // Predicated region
        $region45: #{tpu_custom_call.1} parent=43 // pred_check
          %p1297 = pneg %p174
        $region46: #{tpu_custom_call.1} parent=43 // pred_check_branch
          %1299 = sbr.rel (%p1297) target = $region48
        $region47: #{tpu_custom_call.1} parent=43 // pred_region
          %s1301 = ssub.s32 128, 128
          %1302 = vsyncadd %s1288, %s1301
          %s1303 = smul.addr %s25, 128
          %s1304 = scalar_lea.hbm %s6, %s1303
          %s1306 = sshll.u32 %s1291, 4
          %s1307 = int_to_ptr.vmem [resolvable:$true] %s1306
          %1309 = dma.vmem_to_hbm [thread:$0]  %s1307, 128, %s1304, %s1288
        $region48: #{tpu_custom_call.1} parent=43 // pred_fallthru
          _
        // Predicated region
        $region49: #{tpu_custom_call.1} parent=43 // pred_check
          %p1310 = pneg %p200
        $region50: #{tpu_custom_call.1} parent=43 // pred_check_branch
          %1312 = sbr.rel (%p1310) target = $region52
        $region51: #{tpu_custom_call.1} parent=43 // pred_region
          %s1314 = ssub.s32 128, 128
          %1315 = vsyncadd %s1293, %s1314
          %s1316 = smul.addr %s25, 128
          %s1317 = scalar_lea.hbm %s7, %s1316
          %s1319 = sshll.u32 %s1296, 4
          %s1320 = int_to_ptr.vmem [resolvable:$true] %s1319
          %1322 = dma.vmem_to_hbm [thread:$0]  %s1320, 128, %s1317, %s1293
        $region52: #{tpu_custom_call.1} parent=43 // pred_fallthru
          _
      $region44: #{tpu_custom_call.1} parent=5 // pred_fallthru
        _
      %p1323 = scmp.le.s32.totalorder 2, %s20
      // Predicated region
      $region53: #{tpu_custom_call.1} parent=5 // pred_check
        %p1324 = pneg %p1323
      $region54: #{tpu_custom_call.1} parent=5 // pred_check_branch
        %1326 = sbr.rel (%p1324) target = $region56
      $region55: #{tpu_custom_call.1} parent=5 // pred_region
        %s1327 = ssub.s32 %s20, 2
        // Predicated region
        $region57: #{tpu_custom_call.1} parent=55 // pred_check
          %p1328 = pneg %p180
        $region58: #{tpu_custom_call.1} parent=55 // pred_check_branch
          %1330 = sbr.rel (%p1328) target = $region60
        $region59: #{tpu_custom_call.1} parent=55 // pred_region
          %s1331 = sand.u32 %s165, 1
          %s1332 = scalar_lea.sflag [#allocation3], %s1331
          %s1333 = sand.u32 %s165, 1
          %s1334 = smul.addr %s1333, 8
          %s1335 = scalar_lea.vmem [#allocation2], %s1334
          %1336 = dma.done %s1332, 128
        $region60: #{tpu_custom_call.1} parent=55 // pred_fallthru
          _
        // Predicated region
        $region61: #{tpu_custom_call.1} parent=55 // pred_check
          %p1337 = pneg %p206
        $region62: #{tpu_custom_call.1} parent=55 // pred_check_branch
          %1339 = sbr.rel (%p1337) target = $region64
        $region63: #{tpu_custom_call.1} parent=55 // pred_region
          %s1340 = sand.u32 %s191, 1
          %s1341 = scalar_lea.sflag [#allocation5], %s1340
          %s1342 = sand.u32 %s191, 1
          %s1343 = smul.addr %s1342, 8
          %s1344 = scalar_lea.vmem [#allocation4], %s1343
          %1345 = dma.done %s1341, 128
        $region64: #{tpu_custom_call.1} parent=55 // pred_fallthru
          _
      $region56: #{tpu_custom_call.1} parent=5 // pred_fallthru
        _
    $region6: #{tpu_custom_call.1} parent=1 // loop_footer
      %s24 = sadd.s32 1, %s20
    $region7: #{tpu_custom_call.1} parent=1 // loop_footer_branch
      %19 = sbr.rel target = $region3
    $region8: #{tpu_custom_call.1} parent=1 // loop_exit
      _
    %1346 = vsyncpa [#allocation3], 1
    %s1347 = scalar_lea.sflag [#allocation3], 1
    %1348 = vsyncpa %s1347, 1
    %1349 = vsyncpa [#allocation5], 1
    %s1350 = scalar_lea.sflag [#allocation5], 1
    %1351 = vsyncpa %s1350, 1

</llo_original>
